<compile_context>
chip_gen: v5e
topology: v5e:2x2
jax: 0.10.0
libtpu: 0.0.40
codegen_flags: <defaults>
</compile_context>

<pallas_src>
import math

import jax
import jax.numpy as jnp
from jax import lax
from jax.experimental import pallas as pl
from jax.experimental.pallas import tpu as pltpu


# ----------------------------------------------------------------------------
# Fused Pallas kernel: LSTM stack + caption Linear + Softmax(dim=time)
# ----------------------------------------------------------------------------

def make_decoder_kernel(num_layers, T, B):
    """Whole decoder forward for one batched block (all B rows at once)."""

    def kernel(*refs):
        # refs = (x_ref,                                  (T*B, D)  time-major rows
        #         wx_0, wh_0, b_0, ..., wx_{L-1}, wh_{L-1}, b_{L-1},
        #         wcap_ref, bcap_ref, h0_ref, c0_ref,
        #         out_ref)                                (T, B, W)
        x_ref = refs[0]
        lstm_refs = refs[1:1 + 3 * num_layers]
        wcap_ref, bcap_ref, h0_ref, c0_ref, out_ref = refs[1 + 3 * num_layers:]

        H = h0_ref.shape[2]

        def cell(gates, c):
            # Gate columns were reordered at prep time to [i | f | o | g]:
            # one sigmoid over 3H lanes + one tanh over H lanes (2 EUP pushes).
            sig = jax.nn.sigmoid(gates[:, :3 * H])
            g_g = jnp.tanh(gates[:, 3 * H:])
            i_g = sig[:, 0 * H:1 * H]
            f_g = sig[:, 1 * H:2 * H]
            o_g = sig[:, 2 * H:3 * H]
            c_new = f_g * c + i_g * g_g
            h_new = o_g * jnp.tanh(c_new)
            return h_new, c_new

        hs = None                                   # per-step hidden states (vregs)
        for layer in range(num_layers):
            wx = lstm_refs[3 * layer][...]          # (Din, 4H)
            wh = lstm_refs[3 * layer + 1][...]      # (H,   4H)
            bias = lstm_refs[3 * layer + 2][...]    # (1,   4H) = b_ih + b_hh
            h = h0_ref[layer]                       # (B, H)
            c = c0_ref[layer]                       # (B, H)
            new_hs = []

            if layer == 0:
                # Hoisted input projection: one MXU matmul for all T*B rows.
                gx = (jnp.dot(x_ref[...], wx, preferred_element_type=jnp.float32)
                      + bias)                       # (T*B, 4H), rows = t*B + b
                for t in range(T):
                    gates = gx[t * B:(t + 1) * B, :] + jnp.dot(
                        h, wh, preferred_element_type=jnp.float32)      # (B, 4H)
                    h, c = cell(gates, c)
                    new_hs.append(h)
            else:
                # Per-step input projection from the previous layer's hidden
                # state -> layer-(l) step t only depends on layer-(l-1) step t,
                # so the scheduler can wavefront/overlap the layers.
                for t in range(T):
                    gates = (jnp.dot(hs[t], wx, preferred_element_type=jnp.float32)
                             + jnp.dot(h, wh, preferred_element_type=jnp.float32)
                             + bias)                                    # (B, 4H)
                    h, c = cell(gates, c)
                    new_hs.append(h)

            hs = new_hs

        # Caption head, per timestep (tiny matmuls, off the recurrence chain).
        wcap = wcap_ref[...]                        # (H, W)
        bcap = bcap_ref[...]                        # (1, W)
        logits = [jnp.dot(hs[t], wcap, preferred_element_type=jnp.float32) + bcap
                  for t in range(T)]                # T x (B, W)

        # Softmax over the TIME axis (PyTorch Softmax(dim=1) on (B, T, W)).
        m = logits[0]
        for t in range(1, T):
            m = jnp.maximum(m, logits[t])
        e = [jnp.exp(logits[t] - m) for t in range(T)]
        s = e[0]
        for t in range(1, T):
            s = s + e[t]
        inv_s = 1.0 / s                             # exact divide (rows sum to 1)
        for t in range(T):
            out_ref[t] = e[t] * inv_s               # (B, W) row block at time t

    return kernel


# ----------------------------------------------------------------------------
# One-time parameter preparation (transposes, bias fusion, gate reorder)
# ----------------------------------------------------------------------------

def _reorder_ifgo_to_ifog(w):
    """PyTorch packs gates (i,f,g,o) along 4H; reorder columns to (i,f,o,g)."""
    H = w.shape[-1] // 4
    return jnp.concatenate(
        [w[..., :2 * H], w[..., 3 * H:4 * H], w[..., 2 * H:3 * H]], axis=-1)


def prepare_decoder_params(lstm_params, w_cap, b_cap):
    layers = []
    for (w_ih, w_hh, b_ih, b_hh) in lstm_params:
        wx = _reorder_ifgo_to_ifog(jnp.asarray(w_ih).T)                    # (Din, 4H)
        wh = _reorder_ifgo_to_ifog(jnp.asarray(w_hh).T)                    # (H,   4H)
        bias = _reorder_ifgo_to_ifog(
            (jnp.asarray(b_ih) + jnp.asarray(b_hh)).reshape(1, -1))        # (1,   4H)
        layers.append((wx, wh, bias))
    return {
        "lstm": tuple(layers),
        "w_cap": jnp.asarray(w_cap).T,                                     # (H, W)
        "b_cap": jnp.asarray(b_cap).reshape(1, -1),                        # (1, W)
    }


# ----------------------------------------------------------------------------
# Forward wrapper: one pallas_call, no grid, everything resident in VMEM
# ----------------------------------------------------------------------------

def decoder_forward(word_tensor, encoder_hidden, prepped):
    h0, c0 = encoder_hidden                         # (L, B, H) each (PyTorch layout)
    B, T, D = word_tensor.shape
    L = len(prepped["lstm"])
    W = prepped["w_cap"].shape[1]

    # Tiny one-time relayout: time-major rows so per-step slices are contiguous.
    x_tb = jnp.transpose(word_tensor, (1, 0, 2)).reshape(T * B, D)   # (T*B, D)

    weight_args = []
    for (wx, wh, bias) in prepped["lstm"]:
        weight_args += [wx, wh, bias]

    vmem = pl.BlockSpec(memory_space=pltpu.MemorySpace.VMEM)
    n_inputs = 1 + 3 * L + 4

    # TODO(synk): for much larger B on v7x, add a 2-way "parallel" grid over
    # batch chunks (>=8 rows per chunk) to use both TensorCores.
    out_tbw = pl.pallas_call(
        make_decoder_kernel(L, T, B),
        out_shape=jax.ShapeDtypeStruct((T, B, W), jnp.float32),
        in_specs=[vmem] * n_inputs,
        out_specs=vmem,
    )(x_tb, *weight_args, prepped["w_cap"], prepped["b_cap"], h0, c0)

    return jnp.transpose(out_tbw, (1, 0, 2))        # (B, T, W)


# ----------------------------------------------------------------------------
# Pure-JAX reference (mirrors PyTorch semantics) for a sanity check
# ----------------------------------------------------------------------------

def decoder_reference(word_tensor, encoder_hidden, lstm_params, w_cap, b_cap):
    h0, c0 = encoder_hidden
    x = word_tensor                                  # (B, T, Din)
    for layer, (w_ih, w_hh, b_ih, b_hh) in enumerate(lstm_params):
        H = w_hh.shape[1]

        def cell(carry, xt, w_ih=w_ih, w_hh=w_hh, b_ih=b_ih, b_hh=b_hh, H=H):
            h, c = carry
            gates = xt @ w_ih.T + b_ih + h @ w_hh.T + b_hh
            i = jax.nn.sigmoid(gates[:, 0 * H:1 * H])
            f = jax.nn.sigmoid(gates[:, 1 * H:2 * H])
            g = jnp.tanh(gates[:, 2 * H:3 * H])
            o = jax.nn.sigmoid(gates[:, 3 * H:4 * H])
            c = f * c + i * g
            h = o * jnp.tanh(c)
            return (h, c), h

        xs = jnp.transpose(x, (1, 0, 2))             # (T, B, Din)
        (_, _), ys = lax.scan(cell, (h0[layer], c0[layer]), xs)
        x = jnp.transpose(ys, (1, 0, 2))             # (B, T, H)
    logits = x @ w_cap.T + b_cap
    return jax.nn.softmax(logits, axis=1)            # Softmax(dim=1) over time


# ----------------------------------------------------------------------------
# Main
# ----------------------------------------------------------------------------

if __name__ == "__main__":
    word_dim = 32
    hidden_size = 32
    num_layers = 2
    B, T = 2, 8

    key = jax.random.PRNGKey(0)
    keys = iter(jax.random.split(key, 32))
    bound = 1.0 / math.sqrt(hidden_size)

    def unif(shape):
        return jax.random.uniform(next(keys), shape, jnp.float32, -bound, bound)

    lstm_params = []
    for layer in range(num_layers):
        d_in = word_dim if layer == 0 else hidden_size
        lstm_params.append((unif((4 * hidden_size, d_in)),
                            unif((4 * hidden_size, hidden_size)),
                            unif((4 * hidden_size,)),
                            unif((4 * hidden_size,))))
    w_cap = unif((word_dim, hidden_size))            # nn.Linear(hidden, word_dim)
    b_cap = unif((word_dim,))

    word_tensor = jax.random.normal(next(keys), (B, T, word_dim), jnp.float32)
    h0 = jax.random.normal(next(keys), (num_layers, B, hidden_size), jnp.float32)
    c0 = jax.random.normal(next(keys), (num_layers, B, hidden_size), jnp.float32)
    encoder_hidden = (h0, c0)

    prepped = prepare_decoder_params(lstm_params, w_cap, b_cap)  # one-time prep

    fwd = jax.jit(decoder_forward)
    out = jax.block_until_ready(fwd(word_tensor, encoder_hidden, prepped))

    ref = decoder_reference(word_tensor, encoder_hidden, lstm_params, w_cap, b_cap)
    assert out.shape == (B, T, word_dim), out.shape

    # Exact softmax divide: probabilities along the time axis must sum to 1.
    row_sum_err = float(jnp.max(jnp.abs(out.sum(axis=1) - 1.0)))
    assert row_sum_err < 1e-5, row_sum_err

    # Tolerance headroom covers in-kernel MXU vs. XLA-reference matmul
    # precision differences only (no approximate ops remain).
    err = float(jnp.max(jnp.abs(out - ref)))
    assert err < 1e-3, err
    print("KERNEL_OK")
</pallas_src>

<mosaic_0001>
module attributes {stable_mosaic.version = 11 : i64} {
  func.func @kernel(%arg0: memref<16x32xf32, #tpu.memory_space<vmem>>, %arg1: memref<32x128xf32, #tpu.memory_space<vmem>>, %arg2: memref<32x128xf32, #tpu.memory_space<vmem>>, %arg3: memref<1x128xf32, #tpu.memory_space<vmem>>, %arg4: memref<32x128xf32, #tpu.memory_space<vmem>>, %arg5: memref<32x128xf32, #tpu.memory_space<vmem>>, %arg6: memref<1x128xf32, #tpu.memory_space<vmem>>, %arg7: memref<32x32xf32, #tpu.memory_space<vmem>>, %arg8: memref<1x32xf32, #tpu.memory_space<vmem>>, %arg9: memref<2x2x32xf32, #tpu.memory_space<vmem>>, %arg10: memref<2x2x32xf32, #tpu.memory_space<vmem>>, %arg11: memref<8x2x32xf32, #tpu.memory_space<vmem>>) attributes {dimension_semantics = [], scalar_prefetch = 0 : i64, scratch_operands = 0 : i64, tpu.core_type = #tpu.core_type<tc>} {
    %c0 = arith.constant 0 : index
    %c0_0 = arith.constant 0 : index
    %0 = vector.load %arg1[%c0, %c0_0] : memref<32x128xf32, #tpu.memory_space<vmem>>, vector<32x128xf32>
    %c0_1 = arith.constant 0 : index
    %c0_2 = arith.constant 0 : index
    %1 = vector.load %arg2[%c0_1, %c0_2] : memref<32x128xf32, #tpu.memory_space<vmem>>, vector<32x128xf32>
    %c0_3 = arith.constant 0 : index
    %c0_4 = arith.constant 0 : index
    %2 = vector.load %arg3[%c0_3, %c0_4] : memref<1x128xf32, #tpu.memory_space<vmem>>, vector<1x128xf32>
    %c0_5 = arith.constant 0 : index
    %c0_6 = arith.constant 0 : index
    %c0_7 = arith.constant 0 : index
    %3 = vector.load %arg9[%c0_5, %c0_6, %c0_7] : memref<2x2x32xf32, #tpu.memory_space<vmem>>, vector<1x2x32xf32>
    %4 = vector.shape_cast %3 : vector<1x2x32xf32> to vector<2x32xf32>
    %c0_8 = arith.constant 0 : index
    %c0_9 = arith.constant 0 : index
    %c0_10 = arith.constant 0 : index
    %5 = vector.load %arg10[%c0_8, %c0_9, %c0_10] : memref<2x2x32xf32, #tpu.memory_space<vmem>>, vector<1x2x32xf32>
    %6 = vector.shape_cast %5 : vector<1x2x32xf32> to vector<2x32xf32>
    %c0_11 = arith.constant 0 : index
    %c0_12 = arith.constant 0 : index
    %7 = vector.load %arg0[%c0_11, %c0_12] : memref<16x32xf32, #tpu.memory_space<vmem>>, vector<16x32xf32>
    %cst = arith.constant dense<0.000000e+00> : vector<16x128xf32>
    %8 = tpu.matmul %7, %0, %cst {dimension_numbers = #tpu.dot_dimension_numbers<[1], [0], [0], [1], [0, 0, 1, 1], [], []>} : vector<16x32xf32>, vector<32x128xf32>, vector<16x128xf32> -> vector<16x128xf32>
    %9 = vector.broadcast %2 : vector<1x128xf32> to vector<16x128xf32>
    %10 = arith.addf %8, %9 : vector<16x128xf32>
    %11 = vector.extract_strided_slice %10 {offsets = [0, 0], sizes = [2, 128], strides = [1, 1]} : vector<16x128xf32> to vector<2x128xf32>
    %cst_13 = arith.constant dense<0.000000e+00> : vector<2x128xf32>
    %12 = tpu.matmul %4, %1, %cst_13 {dimension_numbers = #tpu.dot_dimension_numbers<[1], [0], [0], [1], [0, 0, 1, 1], [], []>} : vector<2x32xf32>, vector<32x128xf32>, vector<2x128xf32> -> vector<2x128xf32>
    %13 = arith.addf %11, %12 : vector<2x128xf32>
    %14 = vector.extract_strided_slice %13 {offsets = [0, 0], sizes = [2, 96], strides = [1, 1]} : vector<2x128xf32> to vector<2x96xf32>
    %15 = arith.negf %14 : vector<2x96xf32>
    %16 = math.exp %15 : vector<2x96xf32>
    %cst_14 = arith.constant 1.000000e+00 : f32
    %17 = vector.broadcast %cst_14 : f32 to vector<2x96xf32>
    %18 = arith.addf %17, %16 : vector<2x96xf32>
    %19 = arith.divf %17, %18 : vector<2x96xf32>
    %20 = vector.extract_strided_slice %13 {offsets = [0, 96], sizes = [2, 32], strides = [1, 1]} : vector<2x128xf32> to vector<2x32xf32>
    %21 = math.tanh %20 : vector<2x32xf32>
    %22 = vector.extract_strided_slice %19 {offsets = [0, 0], sizes = [2, 32], strides = [1, 1]} : vector<2x96xf32> to vector<2x32xf32>
    %23 = vector.extract_strided_slice %19 {offsets = [0, 32], sizes = [2, 32], strides = [1, 1]} : vector<2x96xf32> to vector<2x32xf32>
    %24 = vector.extract_strided_slice %19 {offsets = [0, 64], sizes = [2, 32], strides = [1, 1]} : vector<2x96xf32> to vector<2x32xf32>
    %25 = arith.mulf %23, %6 : vector<2x32xf32>
    %26 = arith.mulf %22, %21 : vector<2x32xf32>
    %27 = arith.addf %25, %26 : vector<2x32xf32>
    %28 = math.tanh %27 : vector<2x32xf32>
    %29 = arith.mulf %24, %28 : vector<2x32xf32>
    %30 = vector.extract_strided_slice %10 {offsets = [2, 0], sizes = [2, 128], strides = [1, 1]} : vector<16x128xf32> to vector<2x128xf32>
    %cst_15 = arith.constant dense<0.000000e+00> : vector<2x128xf32>
    %31 = tpu.matmul %29, %1, %cst_15 {dimension_numbers = #tpu.dot_dimension_numbers<[1], [0], [0], [1], [0, 0, 1, 1], [], []>} : vector<2x32xf32>, vector<32x128xf32>, vector<2x128xf32> -> vector<2x128xf32>
    %32 = arith.addf %30, %31 : vector<2x128xf32>
    %33 = vector.extract_strided_slice %32 {offsets = [0, 0], sizes = [2, 96], strides = [1, 1]} : vector<2x128xf32> to vector<2x96xf32>
    %34 = arith.negf %33 : vector<2x96xf32>
    %35 = math.exp %34 : vector<2x96xf32>
    %cst_16 = arith.constant 1.000000e+00 : f32
    %36 = vector.broadcast %cst_16 : f32 to vector<2x96xf32>
    %37 = arith.addf %36, %35 : vector<2x96xf32>
    %38 = arith.divf %36, %37 : vector<2x96xf32>
    %39 = vector.extract_strided_slice %32 {offsets = [0, 96], sizes = [2, 32], strides = [1, 1]} : vector<2x128xf32> to vector<2x32xf32>
    %40 = math.tanh %39 : vector<2x32xf32>
    %41 = vector.extract_strided_slice %38 {offsets = [0, 0], sizes = [2, 32], strides = [1, 1]} : vector<2x96xf32> to vector<2x32xf32>
    %42 = vector.extract_strided_slice %38 {offsets = [0, 32], sizes = [2, 32], strides = [1, 1]} : vector<2x96xf32> to vector<2x32xf32>
    %43 = vector.extract_strided_slice %38 {offsets = [0, 64], sizes = [2, 32], strides = [1, 1]} : vector<2x96xf32> to vector<2x32xf32>
    %44 = arith.mulf %42, %27 : vector<2x32xf32>
    %45 = arith.mulf %41, %40 : vector<2x32xf32>
    %46 = arith.addf %44, %45 : vector<2x32xf32>
    %47 = math.tanh %46 : vector<2x32xf32>
    %48 = arith.mulf %43, %47 : vector<2x32xf32>
    %49 = vector.extract_strided_slice %10 {offsets = [4, 0], sizes = [2, 128], strides = [1, 1]} : vector<16x128xf32> to vector<2x128xf32>
    %cst_17 = arith.constant dense<0.000000e+00> : vector<2x128xf32>
    %50 = tpu.matmul %48, %1, %cst_17 {dimension_numbers = #tpu.dot_dimension_numbers<[1], [0], [0], [1], [0, 0, 1, 1], [], []>} : vector<2x32xf32>, vector<32x128xf32>, vector<2x128xf32> -> vector<2x128xf32>
    %51 = arith.addf %49, %50 : vector<2x128xf32>
    %52 = vector.extract_strided_slice %51 {offsets = [0, 0], sizes = [2, 96], strides = [1, 1]} : vector<2x128xf32> to vector<2x96xf32>
    %53 = arith.negf %52 : vector<2x96xf32>
    %54 = math.exp %53 : vector<2x96xf32>
    %cst_18 = arith.constant 1.000000e+00 : f32
    %55 = vector.broadcast %cst_18 : f32 to vector<2x96xf32>
    %56 = arith.addf %55, %54 : vector<2x96xf32>
    %57 = arith.divf %55, %56 : vector<2x96xf32>
    %58 = vector.extract_strided_slice %51 {offsets = [0, 96], sizes = [2, 32], strides = [1, 1]} : vector<2x128xf32> to vector<2x32xf32>
    %59 = math.tanh %58 : vector<2x32xf32>
    %60 = vector.extract_strided_slice %57 {offsets = [0, 0], sizes = [2, 32], strides = [1, 1]} : vector<2x96xf32> to vector<2x32xf32>
    %61 = vector.extract_strided_slice %57 {offsets = [0, 32], sizes = [2, 32], strides = [1, 1]} : vector<2x96xf32> to vector<2x32xf32>
    %62 = vector.extract_strided_slice %57 {offsets = [0, 64], sizes = [2, 32], strides = [1, 1]} : vector<2x96xf32> to vector<2x32xf32>
    %63 = arith.mulf %61, %46 : vector<2x32xf32>
    %64 = arith.mulf %60, %59 : vector<2x32xf32>
    %65 = arith.addf %63, %64 : vector<2x32xf32>
    %66 = math.tanh %65 : vector<2x32xf32>
    %67 = arith.mulf %62, %66 : vector<2x32xf32>
    %68 = vector.extract_strided_slice %10 {offsets = [6, 0], sizes = [2, 128], strides = [1, 1]} : vector<16x128xf32> to vector<2x128xf32>
    %cst_19 = arith.constant dense<0.000000e+00> : vector<2x128xf32>
    %69 = tpu.matmul %67, %1, %cst_19 {dimension_numbers = #tpu.dot_dimension_numbers<[1], [0], [0], [1], [0, 0, 1, 1], [], []>} : vector<2x32xf32>, vector<32x128xf32>, vector<2x128xf32> -> vector<2x128xf32>
    %70 = arith.addf %68, %69 : vector<2x128xf32>
    %71 = vector.extract_strided_slice %70 {offsets = [0, 0], sizes = [2, 96], strides = [1, 1]} : vector<2x128xf32> to vector<2x96xf32>
    %72 = arith.negf %71 : vector<2x96xf32>
    %73 = math.exp %72 : vector<2x96xf32>
    %cst_20 = arith.constant 1.000000e+00 : f32
    %74 = vector.broadcast %cst_20 : f32 to vector<2x96xf32>
    %75 = arith.addf %74, %73 : vector<2x96xf32>
    %76 = arith.divf %74, %75 : vector<2x96xf32>
    %77 = vector.extract_strided_slice %70 {offsets = [0, 96], sizes = [2, 32], strides = [1, 1]} : vector<2x128xf32> to vector<2x32xf32>
    %78 = math.tanh %77 : vector<2x32xf32>
    %79 = vector.extract_strided_slice %76 {offsets = [0, 0], sizes = [2, 32], strides = [1, 1]} : vector<2x96xf32> to vector<2x32xf32>
    %80 = vector.extract_strided_slice %76 {offsets = [0, 32], sizes = [2, 32], strides = [1, 1]} : vector<2x96xf32> to vector<2x32xf32>
    %81 = vector.extract_strided_slice %76 {offsets = [0, 64], sizes = [2, 32], strides = [1, 1]} : vector<2x96xf32> to vector<2x32xf32>
    %82 = arith.mulf %80, %65 : vector<2x32xf32>
    %83 = arith.mulf %79, %78 : vector<2x32xf32>
    %84 = arith.addf %82, %83 : vector<2x32xf32>
    %85 = math.tanh %84 : vector<2x32xf32>
    %86 = arith.mulf %81, %85 : vector<2x32xf32>
    %87 = vector.extract_strided_slice %10 {offsets = [8, 0], sizes = [2, 128], strides = [1, 1]} : vector<16x128xf32> to vector<2x128xf32>
    %cst_21 = arith.constant dense<0.000000e+00> : vector<2x128xf32>
    %88 = tpu.matmul %86, %1, %cst_21 {dimension_numbers = #tpu.dot_dimension_numbers<[1], [0], [0], [1], [0, 0, 1, 1], [], []>} : vector<2x32xf32>, vector<32x128xf32>, vector<2x128xf32> -> vector<2x128xf32>
    %89 = arith.addf %87, %88 : vector<2x128xf32>
    %90 = vector.extract_strided_slice %89 {offsets = [0, 0], sizes = [2, 96], strides = [1, 1]} : vector<2x128xf32> to vector<2x96xf32>
    %91 = arith.negf %90 : vector<2x96xf32>
    %92 = math.exp %91 : vector<2x96xf32>
    %cst_22 = arith.constant 1.000000e+00 : f32
    %93 = vector.broadcast %cst_22 : f32 to vector<2x96xf32>
    %94 = arith.addf %93, %92 : vector<2x96xf32>
    %95 = arith.divf %93, %94 : vector<2x96xf32>
    %96 = vector.extract_strided_slice %89 {offsets = [0, 96], sizes = [2, 32], strides = [1, 1]} : vector<2x128xf32> to vector<2x32xf32>
    %97 = math.tanh %96 : vector<2x32xf32>
    %98 = vector.extract_strided_slice %95 {offsets = [0, 0], sizes = [2, 32], strides = [1, 1]} : vector<2x96xf32> to vector<2x32xf32>
    %99 = vector.extract_strided_slice %95 {offsets = [0, 32], sizes = [2, 32], strides = [1, 1]} : vector<2x96xf32> to vector<2x32xf32>
    %100 = vector.extract_strided_slice %95 {offsets = [0, 64], sizes = [2, 32], strides = [1, 1]} : vector<2x96xf32> to vector<2x32xf32>
    %101 = arith.mulf %99, %84 : vector<2x32xf32>
    %102 = arith.mulf %98, %97 : vector<2x32xf32>
    %103 = arith.addf %101, %102 : vector<2x32xf32>
    %104 = math.tanh %103 : vector<2x32xf32>
    %105 = arith.mulf %100, %104 : vector<2x32xf32>
    %106 = vector.extract_strided_slice %10 {offsets = [10, 0], sizes = [2, 128], strides = [1, 1]} : vector<16x128xf32> to vector<2x128xf32>
    %cst_23 = arith.constant dense<0.000000e+00> : vector<2x128xf32>
    %107 = tpu.matmul %105, %1, %cst_23 {dimension_numbers = #tpu.dot_dimension_numbers<[1], [0], [0], [1], [0, 0, 1, 1], [], []>} : vector<2x32xf32>, vector<32x128xf32>, vector<2x128xf32> -> vector<2x128xf32>
    %108 = arith.addf %106, %107 : vector<2x128xf32>
    %109 = vector.extract_strided_slice %108 {offsets = [0, 0], sizes = [2, 96], strides = [1, 1]} : vector<2x128xf32> to vector<2x96xf32>
    %110 = arith.negf %109 : vector<2x96xf32>
    %111 = math.exp %110 : vector<2x96xf32>
    %cst_24 = arith.constant 1.000000e+00 : f32
    %112 = vector.broadcast %cst_24 : f32 to vector<2x96xf32>
    %113 = arith.addf %112, %111 : vector<2x96xf32>
    %114 = arith.divf %112, %113 : vector<2x96xf32>
    %115 = vector.extract_strided_slice %108 {offsets = [0, 96], sizes = [2, 32], strides = [1, 1]} : vector<2x128xf32> to vector<2x32xf32>
    %116 = math.tanh %115 : vector<2x32xf32>
    %117 = vector.extract_strided_slice %114 {offsets = [0, 0], sizes = [2, 32], strides = [1, 1]} : vector<2x96xf32> to vector<2x32xf32>
    %118 = vector.extract_strided_slice %114 {offsets = [0, 32], sizes = [2, 32], strides = [1, 1]} : vector<2x96xf32> to vector<2x32xf32>
    %119 = vector.extract_strided_slice %114 {offsets = [0, 64], sizes = [2, 32], strides = [1, 1]} : vector<2x96xf32> to vector<2x32xf32>
    %120 = arith.mulf %118, %103 : vector<2x32xf32>
    %121 = arith.mulf %117, %116 : vector<2x32xf32>
    %122 = arith.addf %120, %121 : vector<2x32xf32>
    %123 = math.tanh %122 : vector<2x32xf32>
    %124 = arith.mulf %119, %123 : vector<2x32xf32>
    %125 = vector.extract_strided_slice %10 {offsets = [12, 0], sizes = [2, 128], strides = [1, 1]} : vector<16x128xf32> to vector<2x128xf32>
    %cst_25 = arith.constant dense<0.000000e+00> : vector<2x128xf32>
    %126 = tpu.matmul %124, %1, %cst_25 {dimension_numbers = #tpu.dot_dimension_numbers<[1], [0], [0], [1], [0, 0, 1, 1], [], []>} : vector<2x32xf32>, vector<32x128xf32>, vector<2x128xf32> -> vector<2x128xf32>
    %127 = arith.addf %125, %126 : vector<2x128xf32>
    %128 = vector.extract_strided_slice %127 {offsets = [0, 0], sizes = [2, 96], strides = [1, 1]} : vector<2x128xf32> to vector<2x96xf32>
    %129 = arith.negf %128 : vector<2x96xf32>
    %130 = math.exp %129 : vector<2x96xf32>
    %cst_26 = arith.constant 1.000000e+00 : f32
    %131 = vector.broadcast %cst_26 : f32 to vector<2x96xf32>
    %132 = arith.addf %131, %130 : vector<2x96xf32>
    %133 = arith.divf %131, %132 : vector<2x96xf32>
    %134 = vector.extract_strided_slice %127 {offsets = [0, 96], sizes = [2, 32], strides = [1, 1]} : vector<2x128xf32> to vector<2x32xf32>
    %135 = math.tanh %134 : vector<2x32xf32>
    %136 = vector.extract_strided_slice %133 {offsets = [0, 0], sizes = [2, 32], strides = [1, 1]} : vector<2x96xf32> to vector<2x32xf32>
    %137 = vector.extract_strided_slice %133 {offsets = [0, 32], sizes = [2, 32], strides = [1, 1]} : vector<2x96xf32> to vector<2x32xf32>
    %138 = vector.extract_strided_slice %133 {offsets = [0, 64], sizes = [2, 32], strides = [1, 1]} : vector<2x96xf32> to vector<2x32xf32>
    %139 = arith.mulf %137, %122 : vector<2x32xf32>
    %140 = arith.mulf %136, %135 : vector<2x32xf32>
    %141 = arith.addf %139, %140 : vector<2x32xf32>
    %142 = math.tanh %141 : vector<2x32xf32>
    %143 = arith.mulf %138, %142 : vector<2x32xf32>
    %144 = vector.extract_strided_slice %10 {offsets = [14, 0], sizes = [2, 128], strides = [1, 1]} : vector<16x128xf32> to vector<2x128xf32>
    %cst_27 = arith.constant dense<0.000000e+00> : vector<2x128xf32>
    %145 = tpu.matmul %143, %1, %cst_27 {dimension_numbers = #tpu.dot_dimension_numbers<[1], [0], [0], [1], [0, 0, 1, 1], [], []>} : vector<2x32xf32>, vector<32x128xf32>, vector<2x128xf32> -> vector<2x128xf32>
    %146 = arith.addf %144, %145 : vector<2x128xf32>
    %147 = vector.extract_strided_slice %146 {offsets = [0, 0], sizes = [2, 96], strides = [1, 1]} : vector<2x128xf32> to vector<2x96xf32>
    %148 = arith.negf %147 : vector<2x96xf32>
    %149 = math.exp %148 : vector<2x96xf32>
    %cst_28 = arith.constant 1.000000e+00 : f32
    %150 = vector.broadcast %cst_28 : f32 to vector<2x96xf32>
    %151 = arith.addf %150, %149 : vector<2x96xf32>
    %152 = arith.divf %150, %151 : vector<2x96xf32>
    %153 = vector.extract_strided_slice %146 {offsets = [0, 96], sizes = [2, 32], strides = [1, 1]} : vector<2x128xf32> to vector<2x32xf32>
    %154 = math.tanh %153 : vector<2x32xf32>
    %155 = vector.extract_strided_slice %152 {offsets = [0, 0], sizes = [2, 32], strides = [1, 1]} : vector<2x96xf32> to vector<2x32xf32>
    %156 = vector.extract_strided_slice %152 {offsets = [0, 32], sizes = [2, 32], strides = [1, 1]} : vector<2x96xf32> to vector<2x32xf32>
    %157 = vector.extract_strided_slice %152 {offsets = [0, 64], sizes = [2, 32], strides = [1, 1]} : vector<2x96xf32> to vector<2x32xf32>
    %158 = arith.mulf %156, %141 : vector<2x32xf32>
    %159 = arith.mulf %155, %154 : vector<2x32xf32>
    %160 = arith.addf %158, %159 : vector<2x32xf32>
    %161 = math.tanh %160 : vector<2x32xf32>
    %162 = arith.mulf %157, %161 : vector<2x32xf32>
    %c0_29 = arith.constant 0 : index
    %c0_30 = arith.constant 0 : index
    %163 = vector.load %arg4[%c0_29, %c0_30] : memref<32x128xf32, #tpu.memory_space<vmem>>, vector<32x128xf32>
    %c0_31 = arith.constant 0 : index
    %c0_32 = arith.constant 0 : index
    %164 = vector.load %arg5[%c0_31, %c0_32] : memref<32x128xf32, #tpu.memory_space<vmem>>, vector<32x128xf32>
    %c0_33 = arith.constant 0 : index
    %c0_34 = arith.constant 0 : index
    %165 = vector.load %arg6[%c0_33, %c0_34] : memref<1x128xf32, #tpu.memory_space<vmem>>, vector<1x128xf32>
    %c1 = arith.constant 1 : index
    %c0_35 = arith.constant 0 : index
    %c0_36 = arith.constant 0 : index
    %166 = vector.load %arg9[%c1, %c0_35, %c0_36] : memref<2x2x32xf32, #tpu.memory_space<vmem>>, vector<1x2x32xf32>
    %167 = vector.shape_cast %166 : vector<1x2x32xf32> to vector<2x32xf32>
    %c1_37 = arith.constant 1 : index
    %c0_38 = arith.constant 0 : index
    %c0_39 = arith.constant 0 : index
    %168 = vector.load %arg10[%c1_37, %c0_38, %c0_39] : memref<2x2x32xf32, #tpu.memory_space<vmem>>, vector<1x2x32xf32>
    %169 = vector.shape_cast %168 : vector<1x2x32xf32> to vector<2x32xf32>
    %cst_40 = arith.constant dense<0.000000e+00> : vector<2x128xf32>
    %170 = tpu.matmul %29, %163, %cst_40 {dimension_numbers = #tpu.dot_dimension_numbers<[1], [0], [0], [1], [0, 0, 1, 1], [], []>} : vector<2x32xf32>, vector<32x128xf32>, vector<2x128xf32> -> vector<2x128xf32>
    %cst_41 = arith.constant dense<0.000000e+00> : vector<2x128xf32>
    %171 = tpu.matmul %167, %164, %cst_41 {dimension_numbers = #tpu.dot_dimension_numbers<[1], [0], [0], [1], [0, 0, 1, 1], [], []>} : vector<2x32xf32>, vector<32x128xf32>, vector<2x128xf32> -> vector<2x128xf32>
    %172 = arith.addf %170, %171 : vector<2x128xf32>
    %173 = vector.broadcast %165 : vector<1x128xf32> to vector<2x128xf32>
    %174 = arith.addf %172, %173 : vector<2x128xf32>
    %175 = vector.extract_strided_slice %174 {offsets = [0, 0], sizes = [2, 96], strides = [1, 1]} : vector<2x128xf32> to vector<2x96xf32>
    %176 = arith.negf %175 : vector<2x96xf32>
    %177 = math.exp %176 : vector<2x96xf32>
    %cst_42 = arith.constant 1.000000e+00 : f32
    %178 = vector.broadcast %cst_42 : f32 to vector<2x96xf32>
    %179 = arith.addf %178, %177 : vector<2x96xf32>
    %180 = arith.divf %178, %179 : vector<2x96xf32>
    %181 = vector.extract_strided_slice %174 {offsets = [0, 96], sizes = [2, 32], strides = [1, 1]} : vector<2x128xf32> to vector<2x32xf32>
    %182 = math.tanh %181 : vector<2x32xf32>
    %183 = vector.extract_strided_slice %180 {offsets = [0, 0], sizes = [2, 32], strides = [1, 1]} : vector<2x96xf32> to vector<2x32xf32>
    %184 = vector.extract_strided_slice %180 {offsets = [0, 32], sizes = [2, 32], strides = [1, 1]} : vector<2x96xf32> to vector<2x32xf32>
    %185 = vector.extract_strided_slice %180 {offsets = [0, 64], sizes = [2, 32], strides = [1, 1]} : vector<2x96xf32> to vector<2x32xf32>
    %186 = arith.mulf %184, %169 : vector<2x32xf32>
    %187 = arith.mulf %183, %182 : vector<2x32xf32>
    %188 = arith.addf %186, %187 : vector<2x32xf32>
    %189 = math.tanh %188 : vector<2x32xf32>
    %190 = arith.mulf %185, %189 : vector<2x32xf32>
    %cst_43 = arith.constant dense<0.000000e+00> : vector<2x128xf32>
    %191 = tpu.matmul %48, %163, %cst_43 {dimension_numbers = #tpu.dot_dimension_numbers<[1], [0], [0], [1], [0, 0, 1, 1], [], []>} : vector<2x32xf32>, vector<32x128xf32>, vector<2x128xf32> -> vector<2x128xf32>
    %cst_44 = arith.constant dense<0.000000e+00> : vector<2x128xf32>
    %192 = tpu.matmul %190, %164, %cst_44 {dimension_numbers = #tpu.dot_dimension_numbers<[1], [0], [0], [1], [0, 0, 1, 1], [], []>} : vector<2x32xf32>, vector<32x128xf32>, vector<2x128xf32> -> vector<2x128xf32>
    %193 = arith.addf %191, %192 : vector<2x128xf32>
    %194 = vector.broadcast %165 : vector<1x128xf32> to vector<2x128xf32>
    %195 = arith.addf %193, %194 : vector<2x128xf32>
    %196 = vector.extract_strided_slice %195 {offsets = [0, 0], sizes = [2, 96], strides = [1, 1]} : vector<2x128xf32> to vector<2x96xf32>
    %197 = arith.negf %196 : vector<2x96xf32>
    %198 = math.exp %197 : vector<2x96xf32>
    %cst_45 = arith.constant 1.000000e+00 : f32
    %199 = vector.broadcast %cst_45 : f32 to vector<2x96xf32>
    %200 = arith.addf %199, %198 : vector<2x96xf32>
    %201 = arith.divf %199, %200 : vector<2x96xf32>
    %202 = vector.extract_strided_slice %195 {offsets = [0, 96], sizes = [2, 32], strides = [1, 1]} : vector<2x128xf32> to vector<2x32xf32>
    %203 = math.tanh %202 : vector<2x32xf32>
    %204 = vector.extract_strided_slice %201 {offsets = [0, 0], sizes = [2, 32], strides = [1, 1]} : vector<2x96xf32> to vector<2x32xf32>
    %205 = vector.extract_strided_slice %201 {offsets = [0, 32], sizes = [2, 32], strides = [1, 1]} : vector<2x96xf32> to vector<2x32xf32>
    %206 = vector.extract_strided_slice %201 {offsets = [0, 64], sizes = [2, 32], strides = [1, 1]} : vector<2x96xf32> to vector<2x32xf32>
    %207 = arith.mulf %205, %188 : vector<2x32xf32>
    %208 = arith.mulf %204, %203 : vector<2x32xf32>
    %209 = arith.addf %207, %208 : vector<2x32xf32>
    %210 = math.tanh %209 : vector<2x32xf32>
    %211 = arith.mulf %206, %210 : vector<2x32xf32>
    %cst_46 = arith.constant dense<0.000000e+00> : vector<2x128xf32>
    %212 = tpu.matmul %67, %163, %cst_46 {dimension_numbers = #tpu.dot_dimension_numbers<[1], [0], [0], [1], [0, 0, 1, 1], [], []>} : vector<2x32xf32>, vector<32x128xf32>, vector<2x128xf32> -> vector<2x128xf32>
    %cst_47 = arith.constant dense<0.000000e+00> : vector<2x128xf32>
    %213 = tpu.matmul %211, %164, %cst_47 {dimension_numbers = #tpu.dot_dimension_numbers<[1], [0], [0], [1], [0, 0, 1, 1], [], []>} : vector<2x32xf32>, vector<32x128xf32>, vector<2x128xf32> -> vector<2x128xf32>
    %214 = arith.addf %212, %213 : vector<2x128xf32>
    %215 = vector.broadcast %165 : vector<1x128xf32> to vector<2x128xf32>
    %216 = arith.addf %214, %215 : vector<2x128xf32>
    %217 = vector.extract_strided_slice %216 {offsets = [0, 0], sizes = [2, 96], strides = [1, 1]} : vector<2x128xf32> to vector<2x96xf32>
    %218 = arith.negf %217 : vector<2x96xf32>
    %219 = math.exp %218 : vector<2x96xf32>
    %cst_48 = arith.constant 1.000000e+00 : f32
    %220 = vector.broadcast %cst_48 : f32 to vector<2x96xf32>
    %221 = arith.addf %220, %219 : vector<2x96xf32>
    %222 = arith.divf %220, %221 : vector<2x96xf32>
    %223 = vector.extract_strided_slice %216 {offsets = [0, 96], sizes = [2, 32], strides = [1, 1]} : vector<2x128xf32> to vector<2x32xf32>
    %224 = math.tanh %223 : vector<2x32xf32>
    %225 = vector.extract_strided_slice %222 {offsets = [0, 0], sizes = [2, 32], strides = [1, 1]} : vector<2x96xf32> to vector<2x32xf32>
    %226 = vector.extract_strided_slice %222 {offsets = [0, 32], sizes = [2, 32], strides = [1, 1]} : vector<2x96xf32> to vector<2x32xf32>
    %227 = vector.extract_strided_slice %222 {offsets = [0, 64], sizes = [2, 32], strides = [1, 1]} : vector<2x96xf32> to vector<2x32xf32>
    %228 = arith.mulf %226, %209 : vector<2x32xf32>
    %229 = arith.mulf %225, %224 : vector<2x32xf32>
    %230 = arith.addf %228, %229 : vector<2x32xf32>
    %231 = math.tanh %230 : vector<2x32xf32>
    %232 = arith.mulf %227, %231 : vector<2x32xf32>
    %cst_49 = arith.constant dense<0.000000e+00> : vector<2x128xf32>
    %233 = tpu.matmul %86, %163, %cst_49 {dimension_numbers = #tpu.dot_dimension_numbers<[1], [0], [0], [1], [0, 0, 1, 1], [], []>} : vector<2x32xf32>, vector<32x128xf32>, vector<2x128xf32> -> vector<2x128xf32>
    %cst_50 = arith.constant dense<0.000000e+00> : vector<2x128xf32>
    %234 = tpu.matmul %232, %164, %cst_50 {dimension_numbers = #tpu.dot_dimension_numbers<[1], [0], [0], [1], [0, 0, 1, 1], [], []>} : vector<2x32xf32>, vector<32x128xf32>, vector<2x128xf32> -> vector<2x128xf32>
    %235 = arith.addf %233, %234 : vector<2x128xf32>
    %236 = vector.broadcast %165 : vector<1x128xf32> to vector<2x128xf32>
    %237 = arith.addf %235, %236 : vector<2x128xf32>
    %238 = vector.extract_strided_slice %237 {offsets = [0, 0], sizes = [2, 96], strides = [1, 1]} : vector<2x128xf32> to vector<2x96xf32>
    %239 = arith.negf %238 : vector<2x96xf32>
    %240 = math.exp %239 : vector<2x96xf32>
    %cst_51 = arith.constant 1.000000e+00 : f32
    %241 = vector.broadcast %cst_51 : f32 to vector<2x96xf32>
    %242 = arith.addf %241, %240 : vector<2x96xf32>
    %243 = arith.divf %241, %242 : vector<2x96xf32>
    %244 = vector.extract_strided_slice %237 {offsets = [0, 96], sizes = [2, 32], strides = [1, 1]} : vector<2x128xf32> to vector<2x32xf32>
    %245 = math.tanh %244 : vector<2x32xf32>
    %246 = vector.extract_strided_slice %243 {offsets = [0, 0], sizes = [2, 32], strides = [1, 1]} : vector<2x96xf32> to vector<2x32xf32>
    %247 = vector.extract_strided_slice %243 {offsets = [0, 32], sizes = [2, 32], strides = [1, 1]} : vector<2x96xf32> to vector<2x32xf32>
    %248 = vector.extract_strided_slice %243 {offsets = [0, 64], sizes = [2, 32], strides = [1, 1]} : vector<2x96xf32> to vector<2x32xf32>
    %249 = arith.mulf %247, %230 : vector<2x32xf32>
    %250 = arith.mulf %246, %245 : vector<2x32xf32>
    %251 = arith.addf %249, %250 : vector<2x32xf32>
    %252 = math.tanh %251 : vector<2x32xf32>
    %253 = arith.mulf %248, %252 : vector<2x32xf32>
    %cst_52 = arith.constant dense<0.000000e+00> : vector<2x128xf32>
    %254 = tpu.matmul %105, %163, %cst_52 {dimension_numbers = #tpu.dot_dimension_numbers<[1], [0], [0], [1], [0, 0, 1, 1], [], []>} : vector<2x32xf32>, vector<32x128xf32>, vector<2x128xf32> -> vector<2x128xf32>
    %cst_53 = arith.constant dense<0.000000e+00> : vector<2x128xf32>
    %255 = tpu.matmul %253, %164, %cst_53 {dimension_numbers = #tpu.dot_dimension_numbers<[1], [0], [0], [1], [0, 0, 1, 1], [], []>} : vector<2x32xf32>, vector<32x128xf32>, vector<2x128xf32> -> vector<2x128xf32>
    %256 = arith.addf %254, %255 : vector<2x128xf32>
    %257 = vector.broadcast %165 : vector<1x128xf32> to vector<2x128xf32>
    %258 = arith.addf %256, %257 : vector<2x128xf32>
    %259 = vector.extract_strided_slice %258 {offsets = [0, 0], sizes = [2, 96], strides = [1, 1]} : vector<2x128xf32> to vector<2x96xf32>
    %260 = arith.negf %259 : vector<2x96xf32>
    %261 = math.exp %260 : vector<2x96xf32>
    %cst_54 = arith.constant 1.000000e+00 : f32
    %262 = vector.broadcast %cst_54 : f32 to vector<2x96xf32>
    %263 = arith.addf %262, %261 : vector<2x96xf32>
    %264 = arith.divf %262, %263 : vector<2x96xf32>
    %265 = vector.extract_strided_slice %258 {offsets = [0, 96], sizes = [2, 32], strides = [1, 1]} : vector<2x128xf32> to vector<2x32xf32>
    %266 = math.tanh %265 : vector<2x32xf32>
    %267 = vector.extract_strided_slice %264 {offsets = [0, 0], sizes = [2, 32], strides = [1, 1]} : vector<2x96xf32> to vector<2x32xf32>
    %268 = vector.extract_strided_slice %264 {offsets = [0, 32], sizes = [2, 32], strides = [1, 1]} : vector<2x96xf32> to vector<2x32xf32>
    %269 = vector.extract_strided_slice %264 {offsets = [0, 64], sizes = [2, 32], strides = [1, 1]} : vector<2x96xf32> to vector<2x32xf32>
    %270 = arith.mulf %268, %251 : vector<2x32xf32>
    %271 = arith.mulf %267, %266 : vector<2x32xf32>
    %272 = arith.addf %270, %271 : vector<2x32xf32>
    %273 = math.tanh %272 : vector<2x32xf32>
    %274 = arith.mulf %269, %273 : vector<2x32xf32>
    %cst_55 = arith.constant dense<0.000000e+00> : vector<2x128xf32>
    %275 = tpu.matmul %124, %163, %cst_55 {dimension_numbers = #tpu.dot_dimension_numbers<[1], [0], [0], [1], [0, 0, 1, 1], [], []>} : vector<2x32xf32>, vector<32x128xf32>, vector<2x128xf32> -> vector<2x128xf32>
    %cst_56 = arith.constant dense<0.000000e+00> : vector<2x128xf32>
    %276 = tpu.matmul %274, %164, %cst_56 {dimension_numbers = #tpu.dot_dimension_numbers<[1], [0], [0], [1], [0, 0, 1, 1], [], []>} : vector<2x32xf32>, vector<32x128xf32>, vector<2x128xf32> -> vector<2x128xf32>
    %277 = arith.addf %275, %276 : vector<2x128xf32>
    %278 = vector.broadcast %165 : vector<1x128xf32> to vector<2x128xf32>
    %279 = arith.addf %277, %278 : vector<2x128xf32>
    %280 = vector.extract_strided_slice %279 {offsets = [0, 0], sizes = [2, 96], strides = [1, 1]} : vector<2x128xf32> to vector<2x96xf32>
    %281 = arith.negf %280 : vector<2x96xf32>
    %282 = math.exp %281 : vector<2x96xf32>
    %cst_57 = arith.constant 1.000000e+00 : f32
    %283 = vector.broadcast %cst_57 : f32 to vector<2x96xf32>
    %284 = arith.addf %283, %282 : vector<2x96xf32>
    %285 = arith.divf %283, %284 : vector<2x96xf32>
    %286 = vector.extract_strided_slice %279 {offsets = [0, 96], sizes = [2, 32], strides = [1, 1]} : vector<2x128xf32> to vector<2x32xf32>
    %287 = math.tanh %286 : vector<2x32xf32>
    %288 = vector.extract_strided_slice %285 {offsets = [0, 0], sizes = [2, 32], strides = [1, 1]} : vector<2x96xf32> to vector<2x32xf32>
    %289 = vector.extract_strided_slice %285 {offsets = [0, 32], sizes = [2, 32], strides = [1, 1]} : vector<2x96xf32> to vector<2x32xf32>
    %290 = vector.extract_strided_slice %285 {offsets = [0, 64], sizes = [2, 32], strides = [1, 1]} : vector<2x96xf32> to vector<2x32xf32>
    %291 = arith.mulf %289, %272 : vector<2x32xf32>
    %292 = arith.mulf %288, %287 : vector<2x32xf32>
    %293 = arith.addf %291, %292 : vector<2x32xf32>
    %294 = math.tanh %293 : vector<2x32xf32>
    %295 = arith.mulf %290, %294 : vector<2x32xf32>
    %cst_58 = arith.constant dense<0.000000e+00> : vector<2x128xf32>
    %296 = tpu.matmul %143, %163, %cst_58 {dimension_numbers = #tpu.dot_dimension_numbers<[1], [0], [0], [1], [0, 0, 1, 1], [], []>} : vector<2x32xf32>, vector<32x128xf32>, vector<2x128xf32> -> vector<2x128xf32>
    %cst_59 = arith.constant dense<0.000000e+00> : vector<2x128xf32>
    %297 = tpu.matmul %295, %164, %cst_59 {dimension_numbers = #tpu.dot_dimension_numbers<[1], [0], [0], [1], [0, 0, 1, 1], [], []>} : vector<2x32xf32>, vector<32x128xf32>, vector<2x128xf32> -> vector<2x128xf32>
    %298 = arith.addf %296, %297 : vector<2x128xf32>
    %299 = vector.broadcast %165 : vector<1x128xf32> to vector<2x128xf32>
    %300 = arith.addf %298, %299 : vector<2x128xf32>
    %301 = vector.extract_strided_slice %300 {offsets = [0, 0], sizes = [2, 96], strides = [1, 1]} : vector<2x128xf32> to vector<2x96xf32>
    %302 = arith.negf %301 : vector<2x96xf32>
    %303 = math.exp %302 : vector<2x96xf32>
    %cst_60 = arith.constant 1.000000e+00 : f32
    %304 = vector.broadcast %cst_60 : f32 to vector<2x96xf32>
    %305 = arith.addf %304, %303 : vector<2x96xf32>
    %306 = arith.divf %304, %305 : vector<2x96xf32>
    %307 = vector.extract_strided_slice %300 {offsets = [0, 96], sizes = [2, 32], strides = [1, 1]} : vector<2x128xf32> to vector<2x32xf32>
    %308 = math.tanh %307 : vector<2x32xf32>
    %309 = vector.extract_strided_slice %306 {offsets = [0, 0], sizes = [2, 32], strides = [1, 1]} : vector<2x96xf32> to vector<2x32xf32>
    %310 = vector.extract_strided_slice %306 {offsets = [0, 32], sizes = [2, 32], strides = [1, 1]} : vector<2x96xf32> to vector<2x32xf32>
    %311 = vector.extract_strided_slice %306 {offsets = [0, 64], sizes = [2, 32], strides = [1, 1]} : vector<2x96xf32> to vector<2x32xf32>
    %312 = arith.mulf %310, %293 : vector<2x32xf32>
    %313 = arith.mulf %309, %308 : vector<2x32xf32>
    %314 = arith.addf %312, %313 : vector<2x32xf32>
    %315 = math.tanh %314 : vector<2x32xf32>
    %316 = arith.mulf %311, %315 : vector<2x32xf32>
    %cst_61 = arith.constant dense<0.000000e+00> : vector<2x128xf32>
    %317 = tpu.matmul %162, %163, %cst_61 {dimension_numbers = #tpu.dot_dimension_numbers<[1], [0], [0], [1], [0, 0, 1, 1], [], []>} : vector<2x32xf32>, vector<32x128xf32>, vector<2x128xf32> -> vector<2x128xf32>
    %cst_62 = arith.constant dense<0.000000e+00> : vector<2x128xf32>
    %318 = tpu.matmul %316, %164, %cst_62 {dimension_numbers = #tpu.dot_dimension_numbers<[1], [0], [0], [1], [0, 0, 1, 1], [], []>} : vector<2x32xf32>, vector<32x128xf32>, vector<2x128xf32> -> vector<2x128xf32>
    %319 = arith.addf %317, %318 : vector<2x128xf32>
    %320 = vector.broadcast %165 : vector<1x128xf32> to vector<2x128xf32>
    %321 = arith.addf %319, %320 : vector<2x128xf32>
    %322 = vector.extract_strided_slice %321 {offsets = [0, 0], sizes = [2, 96], strides = [1, 1]} : vector<2x128xf32> to vector<2x96xf32>
    %323 = arith.negf %322 : vector<2x96xf32>
    %324 = math.exp %323 : vector<2x96xf32>
    %cst_63 = arith.constant 1.000000e+00 : f32
    %325 = vector.broadcast %cst_63 : f32 to vector<2x96xf32>
    %326 = arith.addf %325, %324 : vector<2x96xf32>
    %327 = arith.divf %325, %326 : vector<2x96xf32>
    %328 = vector.extract_strided_slice %321 {offsets = [0, 96], sizes = [2, 32], strides = [1, 1]} : vector<2x128xf32> to vector<2x32xf32>
    %329 = math.tanh %328 : vector<2x32xf32>
    %330 = vector.extract_strided_slice %327 {offsets = [0, 0], sizes = [2, 32], strides = [1, 1]} : vector<2x96xf32> to vector<2x32xf32>
    %331 = vector.extract_strided_slice %327 {offsets = [0, 32], sizes = [2, 32], strides = [1, 1]} : vector<2x96xf32> to vector<2x32xf32>
    %332 = vector.extract_strided_slice %327 {offsets = [0, 64], sizes = [2, 32], strides = [1, 1]} : vector<2x96xf32> to vector<2x32xf32>
    %333 = arith.mulf %331, %314 : vector<2x32xf32>
    %334 = arith.mulf %330, %329 : vector<2x32xf32>
    %335 = arith.addf %333, %334 : vector<2x32xf32>
    %336 = math.tanh %335 : vector<2x32xf32>
    %337 = arith.mulf %332, %336 : vector<2x32xf32>
    %c0_64 = arith.constant 0 : index
    %c0_65 = arith.constant 0 : index
    %338 = vector.load %arg7[%c0_64, %c0_65] : memref<32x32xf32, #tpu.memory_space<vmem>>, vector<32x32xf32>
    %c0_66 = arith.constant 0 : index
    %c0_67 = arith.constant 0 : index
    %339 = vector.load %arg8[%c0_66, %c0_67] : memref<1x32xf32, #tpu.memory_space<vmem>>, vector<1x32xf32>
    %cst_68 = arith.constant dense<0.000000e+00> : vector<2x32xf32>
    %340 = tpu.matmul %190, %338, %cst_68 {dimension_numbers = #tpu.dot_dimension_numbers<[1], [0], [0], [1], [0, 0, 1, 1], [], []>} : vector<2x32xf32>, vector<32x32xf32>, vector<2x32xf32> -> vector<2x32xf32>
    %341 = vector.broadcast %339 : vector<1x32xf32> to vector<2x32xf32>
    %342 = arith.addf %340, %341 : vector<2x32xf32>
    %cst_69 = arith.constant dense<0.000000e+00> : vector<2x32xf32>
    %343 = tpu.matmul %211, %338, %cst_69 {dimension_numbers = #tpu.dot_dimension_numbers<[1], [0], [0], [1], [0, 0, 1, 1], [], []>} : vector<2x32xf32>, vector<32x32xf32>, vector<2x32xf32> -> vector<2x32xf32>
    %344 = vector.broadcast %339 : vector<1x32xf32> to vector<2x32xf32>
    %345 = arith.addf %343, %344 : vector<2x32xf32>
    %cst_70 = arith.constant dense<0.000000e+00> : vector<2x32xf32>
    %346 = tpu.matmul %232, %338, %cst_70 {dimension_numbers = #tpu.dot_dimension_numbers<[1], [0], [0], [1], [0, 0, 1, 1], [], []>} : vector<2x32xf32>, vector<32x32xf32>, vector<2x32xf32> -> vector<2x32xf32>
    %347 = vector.broadcast %339 : vector<1x32xf32> to vector<2x32xf32>
    %348 = arith.addf %346, %347 : vector<2x32xf32>
    %cst_71 = arith.constant dense<0.000000e+00> : vector<2x32xf32>
    %349 = tpu.matmul %253, %338, %cst_71 {dimension_numbers = #tpu.dot_dimension_numbers<[1], [0], [0], [1], [0, 0, 1, 1], [], []>} : vector<2x32xf32>, vector<32x32xf32>, vector<2x32xf32> -> vector<2x32xf32>
    %350 = vector.broadcast %339 : vector<1x32xf32> to vector<2x32xf32>
    %351 = arith.addf %349, %350 : vector<2x32xf32>
    %cst_72 = arith.constant dense<0.000000e+00> : vector<2x32xf32>
    %352 = tpu.matmul %274, %338, %cst_72 {dimension_numbers = #tpu.dot_dimension_numbers<[1], [0], [0], [1], [0, 0, 1, 1], [], []>} : vector<2x32xf32>, vector<32x32xf32>, vector<2x32xf32> -> vector<2x32xf32>
    %353 = vector.broadcast %339 : vector<1x32xf32> to vector<2x32xf32>
    %354 = arith.addf %352, %353 : vector<2x32xf32>
    %cst_73 = arith.constant dense<0.000000e+00> : vector<2x32xf32>
    %355 = tpu.matmul %295, %338, %cst_73 {dimension_numbers = #tpu.dot_dimension_numbers<[1], [0], [0], [1], [0, 0, 1, 1], [], []>} : vector<2x32xf32>, vector<32x32xf32>, vector<2x32xf32> -> vector<2x32xf32>
    %356 = vector.broadcast %339 : vector<1x32xf32> to vector<2x32xf32>
    %357 = arith.addf %355, %356 : vector<2x32xf32>
    %cst_74 = arith.constant dense<0.000000e+00> : vector<2x32xf32>
    %358 = tpu.matmul %316, %338, %cst_74 {dimension_numbers = #tpu.dot_dimension_numbers<[1], [0], [0], [1], [0, 0, 1, 1], [], []>} : vector<2x32xf32>, vector<32x32xf32>, vector<2x32xf32> -> vector<2x32xf32>
    %359 = vector.broadcast %339 : vector<1x32xf32> to vector<2x32xf32>
    %360 = arith.addf %358, %359 : vector<2x32xf32>
    %cst_75 = arith.constant dense<0.000000e+00> : vector<2x32xf32>
    %361 = tpu.matmul %337, %338, %cst_75 {dimension_numbers = #tpu.dot_dimension_numbers<[1], [0], [0], [1], [0, 0, 1, 1], [], []>} : vector<2x32xf32>, vector<32x32xf32>, vector<2x32xf32> -> vector<2x32xf32>
    %362 = vector.broadcast %339 : vector<1x32xf32> to vector<2x32xf32>
    %363 = arith.addf %361, %362 : vector<2x32xf32>
    %364 = arith.maximumf %342, %345 : vector<2x32xf32>
    %365 = arith.maximumf %364, %348 : vector<2x32xf32>
    %366 = arith.maximumf %365, %351 : vector<2x32xf32>
    %367 = arith.maximumf %366, %354 : vector<2x32xf32>
    %368 = arith.maximumf %367, %357 : vector<2x32xf32>
    %369 = arith.maximumf %368, %360 : vector<2x32xf32>
    %370 = arith.maximumf %369, %363 : vector<2x32xf32>
    %371 = arith.subf %342, %370 : vector<2x32xf32>
    %372 = math.exp %371 : vector<2x32xf32>
    %373 = arith.subf %345, %370 : vector<2x32xf32>
    %374 = math.exp %373 : vector<2x32xf32>
    %375 = arith.subf %348, %370 : vector<2x32xf32>
    %376 = math.exp %375 : vector<2x32xf32>
    %377 = arith.subf %351, %370 : vector<2x32xf32>
    %378 = math.exp %377 : vector<2x32xf32>
    %379 = arith.subf %354, %370 : vector<2x32xf32>
    %380 = math.exp %379 : vector<2x32xf32>
    %381 = arith.subf %357, %370 : vector<2x32xf32>
    %382 = math.exp %381 : vector<2x32xf32>
    %383 = arith.subf %360, %370 : vector<2x32xf32>
    %384 = math.exp %383 : vector<2x32xf32>
    %385 = arith.subf %363, %370 : vector<2x32xf32>
    %386 = math.exp %385 : vector<2x32xf32>
    %387 = arith.addf %372, %374 : vector<2x32xf32>
    %388 = arith.addf %387, %376 : vector<2x32xf32>
    %389 = arith.addf %388, %378 : vector<2x32xf32>
    %390 = arith.addf %389, %380 : vector<2x32xf32>
    %391 = arith.addf %390, %382 : vector<2x32xf32>
    %392 = arith.addf %391, %384 : vector<2x32xf32>
    %393 = arith.addf %392, %386 : vector<2x32xf32>
    %cst_76 = arith.constant 1.000000e+00 : f32
    %394 = vector.broadcast %cst_76 : f32 to vector<2x32xf32>
    %395 = arith.divf %394, %393 : vector<2x32xf32>
    %396 = arith.mulf %372, %395 : vector<2x32xf32>
    %c0_77 = arith.constant 0 : index
    %c0_78 = arith.constant 0 : index
    %c0_79 = arith.constant 0 : index
    %397 = vector.load %arg11[%c0_77, %c0_78, %c0_79] : memref<8x2x32xf32, #tpu.memory_space<vmem>>, vector<1x2x32xf32>
    %398 = vector.shape_cast %397 : vector<1x2x32xf32> to vector<2x32xf32>
    %399 = vector.shape_cast %396 : vector<2x32xf32> to vector<1x2x32xf32>
    tpu.vector_store %arg11[%c0_77, %c0_78, %c0_79], %399 {strides = array<i32>} : memref<8x2x32xf32, #tpu.memory_space<vmem>>, vector<1x2x32xf32>,
    %400 = arith.mulf %374, %395 : vector<2x32xf32>
    %c1_80 = arith.constant 1 : index
    %c0_81 = arith.constant 0 : index
    %c0_82 = arith.constant 0 : index
    %401 = vector.load %arg11[%c1_80, %c0_81, %c0_82] : memref<8x2x32xf32, #tpu.memory_space<vmem>>, vector<1x2x32xf32>
    %402 = vector.shape_cast %401 : vector<1x2x32xf32> to vector<2x32xf32>
    %403 = vector.shape_cast %400 : vector<2x32xf32> to vector<1x2x32xf32>
    tpu.vector_store %arg11[%c1_80, %c0_81, %c0_82], %403 {strides = array<i32>} : memref<8x2x32xf32, #tpu.memory_space<vmem>>, vector<1x2x32xf32>,
    %404 = arith.mulf %376, %395 : vector<2x32xf32>
    %c2 = arith.constant 2 : index
    %c0_83 = arith.constant 0 : index
    %c0_84 = arith.constant 0 : index
    %405 = vector.load %arg11[%c2, %c0_83, %c0_84] : memref<8x2x32xf32, #tpu.memory_space<vmem>>, vector<1x2x32xf32>
    %406 = vector.shape_cast %405 : vector<1x2x32xf32> to vector<2x32xf32>
    %407 = vector.shape_cast %404 : vector<2x32xf32> to vector<1x2x32xf32>
    tpu.vector_store %arg11[%c2, %c0_83, %c0_84], %407 {strides = array<i32>} : memref<8x2x32xf32, #tpu.memory_space<vmem>>, vector<1x2x32xf32>,
    %408 = arith.mulf %378, %395 : vector<2x32xf32>
    %c3 = arith.constant 3 : index
    %c0_85 = arith.constant 0 : index
    %c0_86 = arith.constant 0 : index
    %409 = vector.load %arg11[%c3, %c0_85, %c0_86] : memref<8x2x32xf32, #tpu.memory_space<vmem>>, vector<1x2x32xf32>
    %410 = vector.shape_cast %409 : vector<1x2x32xf32> to vector<2x32xf32>
    %411 = vector.shape_cast %408 : vector<2x32xf32> to vector<1x2x32xf32>
    tpu.vector_store %arg11[%c3, %c0_85, %c0_86], %411 {strides = array<i32>} : memref<8x2x32xf32, #tpu.memory_space<vmem>>, vector<1x2x32xf32>,
    %412 = arith.mulf %380, %395 : vector<2x32xf32>
    %c4 = arith.constant 4 : index
    %c0_87 = arith.constant 0 : index
    %c0_88 = arith.constant 0 : index
    %413 = vector.load %arg11[%c4, %c0_87, %c0_88] : memref<8x2x32xf32, #tpu.memory_space<vmem>>, vector<1x2x32xf32>
    %414 = vector.shape_cast %413 : vector<1x2x32xf32> to vector<2x32xf32>
    %415 = vector.shape_cast %412 : vector<2x32xf32> to vector<1x2x32xf32>
    tpu.vector_store %arg11[%c4, %c0_87, %c0_88], %415 {strides = array<i32>} : memref<8x2x32xf32, #tpu.memory_space<vmem>>, vector<1x2x32xf32>,
    %416 = arith.mulf %382, %395 : vector<2x32xf32>
    %c5 = arith.constant 5 : index
    %c0_89 = arith.constant 0 : index
    %c0_90 = arith.constant 0 : index
    %417 = vector.load %arg11[%c5, %c0_89, %c0_90] : memref<8x2x32xf32, #tpu.memory_space<vmem>>, vector<1x2x32xf32>
    %418 = vector.shape_cast %417 : vector<1x2x32xf32> to vector<2x32xf32>
    %419 = vector.shape_cast %416 : vector<2x32xf32> to vector<1x2x32xf32>
    tpu.vector_store %arg11[%c5, %c0_89, %c0_90], %419 {strides = array<i32>} : memref<8x2x32xf32, #tpu.memory_space<vmem>>, vector<1x2x32xf32>,
    %420 = arith.mulf %384, %395 : vector<2x32xf32>
    %c6 = arith.constant 6 : index
    %c0_91 = arith.constant 0 : index
    %c0_92 = arith.constant 0 : index
    %421 = vector.load %arg11[%c6, %c0_91, %c0_92] : memref<8x2x32xf32, #tpu.memory_space<vmem>>, vector<1x2x32xf32>
    %422 = vector.shape_cast %421 : vector<1x2x32xf32> to vector<2x32xf32>
    %423 = vector.shape_cast %420 : vector<2x32xf32> to vector<1x2x32xf32>
    tpu.vector_store %arg11[%c6, %c0_91, %c0_92], %423 {strides = array<i32>} : memref<8x2x32xf32, #tpu.memory_space<vmem>>, vector<1x2x32xf32>,
    %424 = arith.mulf %386, %395 : vector<2x32xf32>
    %c7 = arith.constant 7 : index
    %c0_93 = arith.constant 0 : index
    %c0_94 = arith.constant 0 : index
    %425 = vector.load %arg11[%c7, %c0_93, %c0_94] : memref<8x2x32xf32, #tpu.memory_space<vmem>>, vector<1x2x32xf32>
    %426 = vector.shape_cast %425 : vector<1x2x32xf32> to vector<2x32xf32>
    %427 = vector.shape_cast %424 : vector<2x32xf32> to vector<1x2x32xf32>
    tpu.vector_store %arg11[%c7, %c0_93, %c0_94], %427 {strides = array<i32>} : memref<8x2x32xf32, #tpu.memory_space<vmem>>, vector<1x2x32xf32>,
    return
  }
}

</mosaic_0001>

<llo_original>
// kernel: decoder_forward.1
$region0: #{decoder_forward.1}
  #allocation0 [shape = 'u32[]', space=smem, size = 0x4, offset = 0x4, fixed_abs, tag = 'smem constant byte address 0x4 - core index']
  #allocation1 [shape = 'u32[72,128]{1,0:T(1,128)}', space=vmem, size = 0x9000, scoped, tag = 'internal scratch']
  %s0 = inlined_call_operand.vmem [shape: f32[16,32], index: 0, kind: input, shape index: {}]
  %s1 = inlined_call_operand.vmem [shape: f32[32,128], index: 1, kind: input, shape index: {}]
  %s2 = inlined_call_operand.hbm [shape: f32[32,128], index: 2, kind: input, shape index: {}]
  %s3 = inlined_call_operand.vmem [shape: f32[1,128], index: 3, kind: input, shape index: {}]
  %s4 = inlined_call_operand.hbm [shape: f32[32,128], index: 4, kind: input, shape index: {}]
  %s5 = inlined_call_operand.hbm [shape: f32[32,128], index: 5, kind: input, shape index: {}]
  %s6 = inlined_call_operand.vmem [shape: f32[1,128], index: 6, kind: input, shape index: {}]
  %s7 = inlined_call_operand.hbm [shape: f32[32,32], index: 7, kind: input, shape index: {}]
  %s8 = inlined_call_operand.hbm [shape: f32[1,32], index: 8, kind: input, shape index: {}]
  %s9 = inlined_call_operand.vmem [shape: f32[2,2,32], index: 9, kind: input, shape index: {}]
  %s10 = inlined_call_operand.hbm [shape: f32[2,2,32], index: 10, kind: input, shape index: {}]
  %s11 = inlined_call_operand.vmem [shape: f32[8,2,32], index: 11, kind: output, shape index: {}]
  %s12 = sld [smem:[#allocation0]]
  $region78: #{decoder_forward.1} parent=0
    _
  %s14 = ssub.s32 1, %s12
  %s15 = scalar_select 0, %s14, %s12
  $region1: #{decoder_forward.1} parent=0
    #allocation2 [shape = 'u8[16384]{0}', space=vmem, size = 0x4000, scoped, tag = 'input window, operand 2, single buffered']
    #allocation3 [shape = 's32[1]{0}', space=sflag, size = 0x4, scoped, tag = 'scoped memory for decoder_forward.1']
    #allocation4 [shape = 'u8[16384]{0}', space=vmem, size = 0x4000, scoped, tag = 'input window, operand 4, single buffered']
    #allocation5 [shape = 's32[1]{0}', space=sflag, size = 0x4, scoped, tag = 'scoped memory for decoder_forward.1']
    #allocation6 [shape = 'u8[16384]{0}', space=vmem, size = 0x4000, scoped, tag = 'input window, operand 5, single buffered']
    #allocation7 [shape = 'u8[16384]{0}', space=vmem, size = 0x4000, scoped, tag = 'input window, operand 7, single buffered']
    #allocation8 [shape = 's32[1]{0}', space=sflag, size = 0x4, scoped, tag = 'scoped memory for decoder_forward.1']
    #allocation9 [shape = 'u8[512]{0}', space=vmem, size = 0x400, scoped, tag = 'input window, operand 8, single buffered']
    #allocation10 [shape = 'u8[2048]{0}', space=vmem, size = 0x800, scoped, tag = 'input window, operand 10, single buffered']
    #allocation11 [shape = 's32[1]{0}', space=sflag, size = 0x4, scoped, tag = 'scoped memory for decoder_forward.1']
    %16 = vsyncpa [#allocation3], 0
    %17 = vsyncpa [#allocation5], 0
    %18 = vsyncpa [#allocation8], 0
    %19 = vsyncpa [#allocation11], 0
    // Predicated region
    $region2: #{decoder_forward.1} parent=1 // pred_check
      _
    $region3: #{decoder_forward.1} parent=1 // pred_check_branch
      %21 = sbr.rel (0) target = $region5
    $region4: #{decoder_forward.1} parent=1 // pred_region
      _
    $region5: #{decoder_forward.1} parent=1 // pred_fallthru
      _
    // Predicated region
    $region6: #{decoder_forward.1} parent=1 // pred_check
      _
    $region7: #{decoder_forward.1} parent=1 // pred_check_branch
      %23 = sbr.rel (0) target = $region9
    $region8: #{decoder_forward.1} parent=1 // pred_region
      _
    $region9: #{decoder_forward.1} parent=1 // pred_fallthru
      _
    // Predicated region
    $region10: #{decoder_forward.1} parent=1 // pred_check
      _
    $region11: #{decoder_forward.1} parent=1 // pred_check_branch
      %25 = sbr.rel (0) target = $region13
    $region12: #{decoder_forward.1} parent=1 // pred_region
      %27 = vsyncadd [#allocation3], 0
      %s28 = sshll.u32 %s2, 4
      %s29 = int_to_ptr.hbm [resolvable:$true] %s28
      %s30 = sshll.u32 [#allocation2], 4
      %s31 = int_to_ptr.vmem [resolvable:$true] %s30
      %36 = dma.hbm_to_vmem [thread:$0]  %s29, 512, %s31, [#allocation3], 128, 128, 8
    $region13: #{decoder_forward.1} parent=1 // pred_fallthru
      _
    // Predicated region
    $region14: #{decoder_forward.1} parent=1 // pred_check
      _
    $region15: #{decoder_forward.1} parent=1 // pred_check_branch
      %38 = sbr.rel (0) target = $region17
    $region16: #{decoder_forward.1} parent=1 // pred_region
      _
    $region17: #{decoder_forward.1} parent=1 // pred_fallthru
      _
    // Predicated region
    $region18: #{decoder_forward.1} parent=1 // pred_check
      _
    $region19: #{decoder_forward.1} parent=1 // pred_check_branch
      %40 = sbr.rel (0) target = $region21
    $region20: #{decoder_forward.1} parent=1 // pred_region
      %42 = vsyncadd [#allocation5], 0
      %s43 = sshll.u32 %s4, 4
      %s44 = int_to_ptr.hbm [resolvable:$true] %s43
      %s45 = sshll.u32 [#allocation4], 4
      %s46 = int_to_ptr.vmem [resolvable:$true] %s45
      %51 = dma.hbm_to_vmem [thread:$0]  %s44, 512, %s46, [#allocation5], 128, 128, 8
    $region21: #{decoder_forward.1} parent=1 // pred_fallthru
      _
    // Predicated region
    $region22: #{decoder_forward.1} parent=1 // pred_check
      _
    $region23: #{decoder_forward.1} parent=1 // pred_check_branch
      %53 = sbr.rel (0) target = $region25
    $region24: #{decoder_forward.1} parent=1 // pred_region
      %55 = vsyncadd [#allocation5], 0
      %s56 = sshll.u32 %s5, 4
      %s57 = int_to_ptr.hbm [resolvable:$true] %s56
      %s58 = sshll.u32 [#allocation6], 4
      %s59 = int_to_ptr.vmem [resolvable:$true] %s58
      %64 = dma.hbm_to_vmem [thread:$0]  %s57, 512, %s59, [#allocation5], 128, 128, 8
    $region25: #{decoder_forward.1} parent=1 // pred_fallthru
      _
    // Predicated region
    $region26: #{decoder_forward.1} parent=1 // pred_check
      _
    $region27: #{decoder_forward.1} parent=1 // pred_check_branch
      %66 = sbr.rel (0) target = $region29
    $region28: #{decoder_forward.1} parent=1 // pred_region
      _
    $region29: #{decoder_forward.1} parent=1 // pred_fallthru
      _
    // Predicated region
    $region30: #{decoder_forward.1} parent=1 // pred_check
      _
    $region31: #{decoder_forward.1} parent=1 // pred_check_branch
      %68 = sbr.rel (0) target = $region33
    $region32: #{decoder_forward.1} parent=1 // pred_region
      %70 = vsyncadd [#allocation8], 0
      %s71 = sshll.u32 %s7, 4
      %s72 = int_to_ptr.hbm [resolvable:$true] %s71
      %s73 = sshll.u32 [#allocation7], 4
      %s74 = int_to_ptr.vmem [resolvable:$true] %s73
      %79 = dma.hbm_to_vmem [thread:$0]  %s72, 512, %s74, [#allocation8], 128, 128, 8
    $region33: #{decoder_forward.1} parent=1 // pred_fallthru
      _
    // Predicated region
    $region34: #{decoder_forward.1} parent=1 // pred_check
      _
    $region35: #{decoder_forward.1} parent=1 // pred_check_branch
      %81 = sbr.rel (0) target = $region37
    $region36: #{decoder_forward.1} parent=1 // pred_region
      %83 = vsyncadd [#allocation8], 0
      %s85 = sshll.u32 %s8, 4
      %s86 = int_to_ptr.hbm [resolvable:$true] %s85
      %s87 = sshll.u32 [#allocation9], 4
      %s88 = int_to_ptr.vmem [resolvable:$true] %s87
      %90 = dma.hbm_to_vmem [thread:$0]  %s86, 16, %s88, [#allocation8]
    $region37: #{decoder_forward.1} parent=1 // pred_fallthru
      _
    // Predicated region
    $region38: #{decoder_forward.1} parent=1 // pred_check
      _
    $region39: #{decoder_forward.1} parent=1 // pred_check_branch
      %92 = sbr.rel (0) target = $region41
    $region40: #{decoder_forward.1} parent=1 // pred_region
      _
    $region41: #{decoder_forward.1} parent=1 // pred_fallthru
      _
    // Predicated region
    $region42: #{decoder_forward.1} parent=1 // pred_check
      _
    $region43: #{decoder_forward.1} parent=1 // pred_check_branch
      %94 = sbr.rel (0) target = $region45
    $region44: #{decoder_forward.1} parent=1 // pred_region
      %96 = vsyncadd [#allocation11], 0
      %s97 = sshll.u32 %s10, 4
      %s98 = int_to_ptr.hbm [resolvable:$true] %s97
      %s99 = sshll.u32 [#allocation10], 4
      %s100 = int_to_ptr.vmem [resolvable:$true] %s99
      %105 = dma.hbm_to_vmem [thread:$0]  %s98, 64, %s100, [#allocation11], 32, 32, 2
    $region45: #{decoder_forward.1} parent=1 // pred_fallthru
      _
    // Predicated region
    $region46: #{decoder_forward.1} parent=1 // pred_check
      _
    $region47: #{decoder_forward.1} parent=1 // pred_check_branch
      %107 = sbr.rel (0) target = $region49
    $region48: #{decoder_forward.1} parent=1 // pred_region
      %109 = dma.done [#allocation3], 512
    $region49: #{decoder_forward.1} parent=1 // pred_fallthru
      _
    // Predicated region
    $region50: #{decoder_forward.1} parent=1 // pred_check
      _
    $region51: #{decoder_forward.1} parent=1 // pred_check_branch
      %111 = sbr.rel (0) target = $region53
    $region52: #{decoder_forward.1} parent=1 // pred_region
      %113 = dma.done [#allocation5], 512
    $region53: #{decoder_forward.1} parent=1 // pred_fallthru
      _
    // Predicated region
    $region54: #{decoder_forward.1} parent=1 // pred_check
      _
    $region55: #{decoder_forward.1} parent=1 // pred_check_branch
      %115 = sbr.rel (0) target = $region57
    $region56: #{decoder_forward.1} parent=1 // pred_region
      %117 = dma.done [#allocation5], 512
    $region57: #{decoder_forward.1} parent=1 // pred_fallthru
      _
    // Predicated region
    $region58: #{decoder_forward.1} parent=1 // pred_check
      _
    $region59: #{decoder_forward.1} parent=1 // pred_check_branch
      %119 = sbr.rel (0) target = $region61
    $region60: #{decoder_forward.1} parent=1 // pred_region
      %121 = dma.done [#allocation8], 512
    $region61: #{decoder_forward.1} parent=1 // pred_fallthru
      _
    // Predicated region
    $region62: #{decoder_forward.1} parent=1 // pred_check
      _
    $region63: #{decoder_forward.1} parent=1 // pred_check_branch
      %123 = sbr.rel (0) target = $region65
    $region64: #{decoder_forward.1} parent=1 // pred_region
      %125 = dma.done [#allocation8], 16
    $region65: #{decoder_forward.1} parent=1 // pred_fallthru
      _
    // Predicated region
    $region66: #{decoder_forward.1} parent=1 // pred_check
      _
    $region67: #{decoder_forward.1} parent=1 // pred_check_branch
      %127 = sbr.rel (0) target = $region69
    $region68: #{decoder_forward.1} parent=1 // pred_region
      %129 = dma.done [#allocation11], 64
    $region69: #{decoder_forward.1} parent=1 // pred_fallthru
      _
    %v130 = vld [vmem:[%s1] sm:$0xff]
    %v131 = vld [vmem:[%s1 + $0x8] sm:$0xff]
    %v132 = vld [vmem:[%s1 + $0x10] sm:$0xff]
    %v133 = vld [vmem:[%s1 + $0x18] sm:$0xff]
    %v134 = vld [vmem:[#allocation2] sm:$0xff]
    %v135 = vld [vmem:[#allocation2 + $0x8] sm:$0xff]
    %v136 = vld [vmem:[#allocation2 + $0x10] sm:$0xff]
    %v137 = vld [vmem:[#allocation2 + $0x18] sm:$0xff]
    %v138 = vld [vmem:[%s3] sm:$0x1]
    %v139 = vld [vmem:[%s9] sm:$0x3]
    %v140 = vld [vmem:[#allocation10] sm:$0x3]
    %v141 = vld [vmem:[%s0] sm:$0xff]
    %v142 = vld [vmem:[%s0 + $0x8] sm:$0xff]
    %v144 = vperm.slane %v138, 0
    %vm146 = vcmask 261120
    %v148 = vsel %vm146, %v141, 0
    %v151 = vsel %vm146, %v142, 0
    %153 = vmatpush.msra.mxu0 0.0
    %154 = vmatpush.msra.mxu0 0.0
    %155 = vmatpush.msra.mxu0 0.0
    %156 = vmatpush.msra.mxu0 0.0
    %157 = vmatpush.msra.mxu0 0.0
    %158 = vmatpush.msra.mxu0 0.0
    %159 = vmatpush.msra.mxu0 0.0
    %160 = vmatpush.msra.mxu0 0.0
    %161 = vmatpush.msra.mxu0 0.0
    %162 = vmatpush.msra.mxu0 0.0
    %163 = vmatpush.msra.mxu0 0.0
    %164 = vmatpush.msra.mxu0 0.0
    %165 = vmatpush.msra.mxu0 %v133
    %166 = vmatpush.msra.mxu0 %v132
    %167 = vmatpush.msra.mxu0 %v131
    %168 = vmatpush.msra.mxu0 %v130
    %169 = vmatmul.f32.gmra.mxu0 %v148
    %v170 = vpop.f32.mrf.mxu0
    %v171 = vadd.f32 %v144, %v170
    %172 = vmatmul.f32.gmra.mxu0 %v151
    %v173 = vpop.f32.mrf.mxu0
    %v174 = vadd.f32 %v144, %v173
    %175 = vdwg.mxu0
    %v177 = vsel %vm146, %v139, 0
    %179 = vmatpush.msra.mxu0 0.0
    %180 = vmatpush.msra.mxu0 0.0
    %181 = vmatpush.msra.mxu0 0.0
    %182 = vmatpush.msra.mxu0 0.0
    %183 = vmatpush.msra.mxu0 0.0
    %184 = vmatpush.msra.mxu0 0.0
    %185 = vmatpush.msra.mxu0 0.0
    %186 = vmatpush.msra.mxu0 0.0
    %187 = vmatpush.msra.mxu0 0.0
    %188 = vmatpush.msra.mxu0 0.0
    %189 = vmatpush.msra.mxu0 0.0
    %190 = vmatpush.msra.mxu0 0.0
    %191 = vmatpush.msra.mxu0 %v137
    %192 = vmatpush.msra.mxu0 %v136
    %193 = vmatpush.msra.mxu0 %v135
    %194 = vmatpush.msra.mxu0 %v134
    %195 = vmatmul.f32.gmra.mxu0 %v177
    %v196 = vpop.f32.mrf.mxu0
    %v197 = vadd.f32 0.0, %v196
    %198 = vdwg.mxu0
    %v199 = vadd.f32 %v171, %v197
    %v200 = vxor.u32 %v199, 2147483648
    %v201 = vmul.f32 %v200, 1.442695
    %v202 = vpow.pop %v201
    %v203 = vadd.f32 %v202, 1.0
    %v204 = vrcp.pop %v203
    %v205 = vmul.f32 %v203, %v204
    %v206 = vsub.f32 1.0, %v205
    %v207 = vmul.f32 %v204, %v206
    %v208 = vadd.f32 %v204, %v207
    %vm209 = vweird.f32 %v203
    %vm210 = vweird.f32 %v204
    %vm211 = vmor %vm209, %vm210
    %v212 = vsel %vm211, %v204, %v208
    %v213 = vand.u32 2147483647, %v203
    %vm214 = vcmp.eq.f32.partialorder %v213, 8.507059e+37
    %v215 = vand.u32 %v203, 2147483648
    %v216 = vor.u32 1.1754944e-38, %v215
    %v217 = vsel %vm214, %v216, %v212
    %v218 = vmul.f32 1.0, %v217
    %v219 = vtanh.pop %v199
    %221 = vrot.lane.b32.xlu0 %v140, 32
    %v222 = vpop.permute.xlu0 %221
    %v224 = vmul.f32 %v218, %v222
    %226 = vrot.lane.b32.xlu0 %v219, 32
    %v227 = vpop.permute.xlu0 %226
    %v229 = vmul.f32 %v218, %v227
    %231 = vrot.lane.b32.xlu0 %v229, 32
    %v232 = vpop.permute.xlu0 %231
    %v234 = vadd.f32 %v224, %v232
    %v235 = vtanh.pop %v234
    %237 = vrot.lane.b32.xlu0 %v235, 32
    %v238 = vpop.permute.xlu0 %237
    %v240 = vmul.f32 %v218, %v238
    %242 = vrot.lane.b32.xlu0 %v240, 64
    %v243 = vpop.permute.xlu0 %242
    %v244 = vsel %vm146, %v243, 0
    %246 = vmatpush.msra.mxu0 0.0
    %247 = vmatpush.msra.mxu0 0.0
    %248 = vmatpush.msra.mxu0 0.0
    %249 = vmatpush.msra.mxu0 0.0
    %250 = vmatpush.msra.mxu0 0.0
    %251 = vmatpush.msra.mxu0 0.0
    %252 = vmatpush.msra.mxu0 0.0
    %253 = vmatpush.msra.mxu0 0.0
    %254 = vmatpush.msra.mxu0 0.0
    %255 = vmatpush.msra.mxu0 0.0
    %256 = vmatpush.msra.mxu0 0.0
    %257 = vmatpush.msra.mxu0 0.0
    %258 = vmatpush.msra.mxu0 %v137
    %259 = vmatpush.msra.mxu0 %v136
    %260 = vmatpush.msra.mxu0 %v135
    %261 = vmatpush.msra.mxu0 %v134
    %262 = vmatmul.f32.gmra.mxu0 %v244
    %v263 = vpop.f32.mrf.mxu0
    %v264 = vadd.f32 0.0, %v263
    %265 = vdwg.mxu0
    %v267 = vrot.slane %v264, 6
    %v269 = vadd.f32 %v171, %v267
    %v270 = vxor.u32 %v269, 2147483648
    %v271 = vmul.f32 %v270, 1.442695
    %v272 = vpow.pop %v271
    %v273 = vadd.f32 %v272, 1.0
    %v274 = vrcp.pop %v273
    %v275 = vmul.f32 %v273, %v274
    %v276 = vsub.f32 1.0, %v275
    %v277 = vmul.f32 %v274, %v276
    %v278 = vadd.f32 %v274, %v277
    %vm279 = vweird.f32 %v273
    %vm280 = vweird.f32 %v274
    %vm281 = vmor %vm279, %vm280
    %v282 = vsel %vm281, %v274, %v278
    %v283 = vand.u32 2147483647, %v273
    %vm284 = vcmp.eq.f32.partialorder %v283, 8.507059e+37
    %v285 = vand.u32 %v273, 2147483648
    %v286 = vor.u32 1.1754944e-38, %v285
    %v287 = vsel %vm284, %v286, %v282
    %v288 = vmul.f32 1.0, %v287
    %v289 = vtanh.pop %v269
    %v291 = vrot.slane %v234, 6
    %v293 = vmul.f32 %v288, %v291
    %295 = vrot.lane.b32.xlu0 %v289, 32
    %v296 = vpop.permute.xlu0 %295
    %v298 = vmul.f32 %v288, %v296
    %300 = vrot.lane.b32.xlu0 %v298, 32
    %v301 = vpop.permute.xlu0 %300
    %v303 = vadd.f32 %v293, %v301
    %v304 = vtanh.pop %v303
    %306 = vrot.lane.b32.xlu0 %v304, 32
    %v307 = vpop.permute.xlu0 %306
    %v309 = vmul.f32 %v288, %v307
    %v311 = vrot.slane %v309, 2
    %312 = vrot.lane.b32.xlu0 %v311, 64
    %v313 = vpop.permute.xlu0 %312
    %v314 = vsel %vm146, %v313, 0
    %316 = vmatpush.msra.mxu0 0.0
    %317 = vmatpush.msra.mxu0 0.0
    %318 = vmatpush.msra.mxu0 0.0
    %319 = vmatpush.msra.mxu0 0.0
    %320 = vmatpush.msra.mxu0 0.0
    %321 = vmatpush.msra.mxu0 0.0
    %322 = vmatpush.msra.mxu0 0.0
    %323 = vmatpush.msra.mxu0 0.0
    %324 = vmatpush.msra.mxu0 0.0
    %325 = vmatpush.msra.mxu0 0.0
    %326 = vmatpush.msra.mxu0 0.0
    %327 = vmatpush.msra.mxu0 0.0
    %328 = vmatpush.msra.mxu0 %v137
    %329 = vmatpush.msra.mxu0 %v136
    %330 = vmatpush.msra.mxu0 %v135
    %331 = vmatpush.msra.mxu0 %v134
    %332 = vmatmul.f32.gmra.mxu0 %v314
    %v333 = vpop.f32.mrf.mxu0
    %v334 = vadd.f32 0.0, %v333
    %335 = vdwg.mxu0
    %v337 = vrot.slane %v334, 4
    %v339 = vadd.f32 %v171, %v337
    %v340 = vxor.u32 %v339, 2147483648
    %v341 = vmul.f32 %v340, 1.442695
    %v342 = vpow.pop %v341
    %v343 = vadd.f32 %v342, 1.0
    %v344 = vrcp.pop %v343
    %v345 = vmul.f32 %v343, %v344
    %v346 = vsub.f32 1.0, %v345
    %v347 = vmul.f32 %v344, %v346
    %v348 = vadd.f32 %v344, %v347
    %vm349 = vweird.f32 %v343
    %vm350 = vweird.f32 %v344
    %vm351 = vmor %vm349, %vm350
    %v352 = vsel %vm351, %v344, %v348
    %v353 = vand.u32 2147483647, %v343
    %vm354 = vcmp.eq.f32.partialorder %v353, 8.507059e+37
    %v355 = vand.u32 %v343, 2147483648
    %v356 = vor.u32 1.1754944e-38, %v355
    %v357 = vsel %vm354, %v356, %v352
    %v358 = vmul.f32 1.0, %v357
    %v359 = vtanh.pop %v339
    %v361 = vrot.slane %v303, 6
    %v363 = vmul.f32 %v358, %v361
    %365 = vrot.lane.b32.xlu0 %v359, 32
    %v366 = vpop.permute.xlu0 %365
    %v368 = vmul.f32 %v358, %v366
    %370 = vrot.lane.b32.xlu0 %v368, 32
    %v371 = vpop.permute.xlu0 %370
    %v373 = vadd.f32 %v363, %v371
    %v374 = vtanh.pop %v373
    %376 = vrot.lane.b32.xlu0 %v374, 32
    %v377 = vpop.permute.xlu0 %376
    %v379 = vmul.f32 %v358, %v377
    %v381 = vrot.slane %v379, 4
    %382 = vrot.lane.b32.xlu0 %v381, 64
    %v383 = vpop.permute.xlu0 %382
    %v384 = vsel %vm146, %v383, 0
    %386 = vmatpush.msra.mxu0 0.0
    %387 = vmatpush.msra.mxu0 0.0
    %388 = vmatpush.msra.mxu0 0.0
    %389 = vmatpush.msra.mxu0 0.0
    %390 = vmatpush.msra.mxu0 0.0
    %391 = vmatpush.msra.mxu0 0.0
    %392 = vmatpush.msra.mxu0 0.0
    %393 = vmatpush.msra.mxu0 0.0
    %394 = vmatpush.msra.mxu0 0.0
    %395 = vmatpush.msra.mxu0 0.0
    %396 = vmatpush.msra.mxu0 0.0
    %397 = vmatpush.msra.mxu0 0.0
    %398 = vmatpush.msra.mxu0 %v137
    %399 = vmatpush.msra.mxu0 %v136
    %400 = vmatpush.msra.mxu0 %v135
    %401 = vmatpush.msra.mxu0 %v134
    %402 = vmatmul.f32.gmra.mxu0 %v384
    %v403 = vpop.f32.mrf.mxu0
    %v404 = vadd.f32 0.0, %v403
    %405 = vdwg.mxu0
    %v407 = vrot.slane %v404, 2
    %v409 = vadd.f32 %v171, %v407
    %v410 = vxor.u32 %v409, 2147483648
    %v411 = vmul.f32 %v410, 1.442695
    %v412 = vpow.pop %v411
    %v413 = vadd.f32 %v412, 1.0
    %v414 = vrcp.pop %v413
    %v415 = vmul.f32 %v413, %v414
    %v416 = vsub.f32 1.0, %v415
    %v417 = vmul.f32 %v414, %v416
    %v418 = vadd.f32 %v414, %v417
    %vm419 = vweird.f32 %v413
    %vm420 = vweird.f32 %v414
    %vm421 = vmor %vm419, %vm420
    %v422 = vsel %vm421, %v414, %v418
    %v423 = vand.u32 2147483647, %v413
    %vm424 = vcmp.eq.f32.partialorder %v423, 8.507059e+37
    %v425 = vand.u32 %v413, 2147483648
    %v426 = vor.u32 1.1754944e-38, %v425
    %v427 = vsel %vm424, %v426, %v422
    %v428 = vmul.f32 1.0, %v427
    %v429 = vtanh.pop %v409
    %v431 = vrot.slane %v373, 6
    %v433 = vmul.f32 %v428, %v431
    %435 = vrot.lane.b32.xlu0 %v429, 32
    %v436 = vpop.permute.xlu0 %435
    %v438 = vmul.f32 %v428, %v436
    %440 = vrot.lane.b32.xlu0 %v438, 32
    %v441 = vpop.permute.xlu0 %440
    %v443 = vadd.f32 %v433, %v441
    %v444 = vtanh.pop %v443
    %446 = vrot.lane.b32.xlu0 %v444, 32
    %v447 = vpop.permute.xlu0 %446
    %v449 = vmul.f32 %v428, %v447
    %v451 = vrot.slane %v449, 6
    %452 = vrot.lane.b32.xlu0 %v451, 64
    %v453 = vpop.permute.xlu0 %452
    %v454 = vsel %vm146, %v453, 0
    %456 = vmatpush.msra.mxu0 0.0
    %457 = vmatpush.msra.mxu0 0.0
    %458 = vmatpush.msra.mxu0 0.0
    %459 = vmatpush.msra.mxu0 0.0
    %460 = vmatpush.msra.mxu0 0.0
    %461 = vmatpush.msra.mxu0 0.0
    %462 = vmatpush.msra.mxu0 0.0
    %463 = vmatpush.msra.mxu0 0.0
    %464 = vmatpush.msra.mxu0 0.0
    %465 = vmatpush.msra.mxu0 0.0
    %466 = vmatpush.msra.mxu0 0.0
    %467 = vmatpush.msra.mxu0 0.0
    %468 = vmatpush.msra.mxu0 %v137
    %469 = vmatpush.msra.mxu0 %v136
    %470 = vmatpush.msra.mxu0 %v135
    %471 = vmatpush.msra.mxu0 %v134
    %472 = vmatmul.f32.gmra.mxu0 %v454
    %v473 = vpop.f32.mrf.mxu0
    %v474 = vadd.f32 0.0, %v473
    %475 = vdwg.mxu0
    %v476 = vadd.f32 %v174, %v474
    %v477 = vxor.u32 %v476, 2147483648
    %v478 = vmul.f32 %v477, 1.442695
    %v479 = vpow.pop %v478
    %v480 = vadd.f32 %v479, 1.0
    %v481 = vrcp.pop %v480
    %v482 = vmul.f32 %v480, %v481
    %v483 = vsub.f32 1.0, %v482
    %v484 = vmul.f32 %v481, %v483
    %v485 = vadd.f32 %v481, %v484
    %vm486 = vweird.f32 %v480
    %vm487 = vweird.f32 %v481
    %vm488 = vmor %vm486, %vm487
    %v489 = vsel %vm488, %v481, %v485
    %v490 = vand.u32 2147483647, %v480
    %vm491 = vcmp.eq.f32.partialorder %v490, 8.507059e+37
    %v492 = vand.u32 %v480, 2147483648
    %v493 = vor.u32 1.1754944e-38, %v492
    %v494 = vsel %vm491, %v493, %v489
    %v495 = vmul.f32 1.0, %v494
    %v496 = vtanh.pop %v476
    %v498 = vrot.slane %v443, 6
    %v500 = vmul.f32 %v495, %v498
    %502 = vrot.lane.b32.xlu0 %v496, 32
    %v503 = vpop.permute.xlu0 %502
    %v505 = vmul.f32 %v495, %v503
    %507 = vrot.lane.b32.xlu0 %v505, 32
    %v508 = vpop.permute.xlu0 %507
    %v510 = vadd.f32 %v500, %v508
    %v511 = vtanh.pop %v510
    %513 = vrot.lane.b32.xlu0 %v511, 32
    %v514 = vpop.permute.xlu0 %513
    %v516 = vmul.f32 %v495, %v514
    %518 = vrot.lane.b32.xlu0 %v516, 64
    %v519 = vpop.permute.xlu0 %518
    %v520 = vsel %vm146, %v519, 0
    %522 = vmatpush.msra.mxu0 0.0
    %523 = vmatpush.msra.mxu0 0.0
    %524 = vmatpush.msra.mxu0 0.0
    %525 = vmatpush.msra.mxu0 0.0
    %526 = vmatpush.msra.mxu0 0.0
    %527 = vmatpush.msra.mxu0 0.0
    %528 = vmatpush.msra.mxu0 0.0
    %529 = vmatpush.msra.mxu0 0.0
    %530 = vmatpush.msra.mxu0 0.0
    %531 = vmatpush.msra.mxu0 0.0
    %532 = vmatpush.msra.mxu0 0.0
    %533 = vmatpush.msra.mxu0 0.0
    %534 = vmatpush.msra.mxu0 %v137
    %535 = vmatpush.msra.mxu0 %v136
    %536 = vmatpush.msra.mxu0 %v135
    %537 = vmatpush.msra.mxu0 %v134
    %538 = vmatmul.f32.gmra.mxu0 %v520
    %v539 = vpop.f32.mrf.mxu0
    %v540 = vadd.f32 0.0, %v539
    %541 = vdwg.mxu0
    %v543 = vrot.slane %v540, 6
    %v545 = vadd.f32 %v174, %v543
    %v546 = vxor.u32 %v545, 2147483648
    %v547 = vmul.f32 %v546, 1.442695
    %v548 = vpow.pop %v547
    %v549 = vadd.f32 %v548, 1.0
    %v550 = vrcp.pop %v549
    %v551 = vmul.f32 %v549, %v550
    %v552 = vsub.f32 1.0, %v551
    %v553 = vmul.f32 %v550, %v552
    %v554 = vadd.f32 %v550, %v553
    %vm555 = vweird.f32 %v549
    %vm556 = vweird.f32 %v550
    %vm557 = vmor %vm555, %vm556
    %v558 = vsel %vm557, %v550, %v554
    %v559 = vand.u32 2147483647, %v549
    %vm560 = vcmp.eq.f32.partialorder %v559, 8.507059e+37
    %v561 = vand.u32 %v549, 2147483648
    %v562 = vor.u32 1.1754944e-38, %v561
    %v563 = vsel %vm560, %v562, %v558
    %v564 = vmul.f32 1.0, %v563
    %v565 = vtanh.pop %v545
    %v567 = vrot.slane %v510, 6
    %v569 = vmul.f32 %v564, %v567
    %571 = vrot.lane.b32.xlu0 %v565, 32
    %v572 = vpop.permute.xlu0 %571
    %v574 = vmul.f32 %v564, %v572
    %576 = vrot.lane.b32.xlu0 %v574, 32
    %v577 = vpop.permute.xlu0 %576
    %v579 = vadd.f32 %v569, %v577
    %v580 = vtanh.pop %v579
    %582 = vrot.lane.b32.xlu0 %v580, 32
    %v583 = vpop.permute.xlu0 %582
    %v585 = vmul.f32 %v564, %v583
    %v587 = vrot.slane %v585, 2
    %588 = vrot.lane.b32.xlu0 %v587, 64
    %v589 = vpop.permute.xlu0 %588
    %v590 = vsel %vm146, %v589, 0
    %592 = vmatpush.msra.mxu0 0.0
    %593 = vmatpush.msra.mxu0 0.0
    %594 = vmatpush.msra.mxu0 0.0
    %595 = vmatpush.msra.mxu0 0.0
    %596 = vmatpush.msra.mxu0 0.0
    %597 = vmatpush.msra.mxu0 0.0
    %598 = vmatpush.msra.mxu0 0.0
    %599 = vmatpush.msra.mxu0 0.0
    %600 = vmatpush.msra.mxu0 0.0
    %601 = vmatpush.msra.mxu0 0.0
    %602 = vmatpush.msra.mxu0 0.0
    %603 = vmatpush.msra.mxu0 0.0
    %604 = vmatpush.msra.mxu0 %v137
    %605 = vmatpush.msra.mxu0 %v136
    %606 = vmatpush.msra.mxu0 %v135
    %607 = vmatpush.msra.mxu0 %v134
    %608 = vmatmul.f32.gmra.mxu0 %v590
    %v609 = vpop.f32.mrf.mxu0
    %v610 = vadd.f32 0.0, %v609
    %611 = vdwg.mxu0
    %v613 = vrot.slane %v610, 4
    %v615 = vadd.f32 %v174, %v613
    %v616 = vxor.u32 %v615, 2147483648
    %v617 = vmul.f32 %v616, 1.442695
    %v618 = vpow.pop %v617
    %v619 = vadd.f32 %v618, 1.0
    %v620 = vrcp.pop %v619
    %v621 = vmul.f32 %v619, %v620
    %v622 = vsub.f32 1.0, %v621
    %v623 = vmul.f32 %v620, %v622
    %v624 = vadd.f32 %v620, %v623
    %vm625 = vweird.f32 %v619
    %vm626 = vweird.f32 %v620
    %vm627 = vmor %vm625, %vm626
    %v628 = vsel %vm627, %v620, %v624
    %v629 = vand.u32 2147483647, %v619
    %vm630 = vcmp.eq.f32.partialorder %v629, 8.507059e+37
    %v631 = vand.u32 %v619, 2147483648
    %v632 = vor.u32 1.1754944e-38, %v631
    %v633 = vsel %vm630, %v632, %v628
    %v634 = vmul.f32 1.0, %v633
    %v635 = vtanh.pop %v615
    %v637 = vrot.slane %v579, 6
    %v639 = vmul.f32 %v634, %v637
    %641 = vrot.lane.b32.xlu0 %v635, 32
    %v642 = vpop.permute.xlu0 %641
    %v644 = vmul.f32 %v634, %v642
    %646 = vrot.lane.b32.xlu0 %v644, 32
    %v647 = vpop.permute.xlu0 %646
    %v649 = vadd.f32 %v639, %v647
    %v650 = vtanh.pop %v649
    %652 = vrot.lane.b32.xlu0 %v650, 32
    %v653 = vpop.permute.xlu0 %652
    %v655 = vmul.f32 %v634, %v653
    %v657 = vrot.slane %v655, 4
    %658 = vrot.lane.b32.xlu0 %v657, 64
    %v659 = vpop.permute.xlu0 %658
    %v660 = vsel %vm146, %v659, 0
    %662 = vmatpush.msra.mxu0 0.0
    %663 = vmatpush.msra.mxu0 0.0
    %664 = vmatpush.msra.mxu0 0.0
    %665 = vmatpush.msra.mxu0 0.0
    %666 = vmatpush.msra.mxu0 0.0
    %667 = vmatpush.msra.mxu0 0.0
    %668 = vmatpush.msra.mxu0 0.0
    %669 = vmatpush.msra.mxu0 0.0
    %670 = vmatpush.msra.mxu0 0.0
    %671 = vmatpush.msra.mxu0 0.0
    %672 = vmatpush.msra.mxu0 0.0
    %673 = vmatpush.msra.mxu0 0.0
    %674 = vmatpush.msra.mxu0 %v137
    %675 = vmatpush.msra.mxu0 %v136
    %676 = vmatpush.msra.mxu0 %v135
    %677 = vmatpush.msra.mxu0 %v134
    %678 = vmatmul.f32.gmra.mxu0 %v660
    %v679 = vpop.f32.mrf.mxu0
    %v680 = vadd.f32 0.0, %v679
    %681 = vdwg.mxu0
    %v683 = vrot.slane %v680, 2
    %v685 = vadd.f32 %v174, %v683
    %v686 = vxor.u32 %v685, 2147483648
    %v687 = vmul.f32 %v686, 1.442695
    %v688 = vpow.pop %v687
    %v689 = vadd.f32 %v688, 1.0
    %v690 = vrcp.pop %v689
    %v691 = vmul.f32 %v689, %v690
    %v692 = vsub.f32 1.0, %v691
    %v693 = vmul.f32 %v690, %v692
    %v694 = vadd.f32 %v690, %v693
    %vm695 = vweird.f32 %v689
    %vm696 = vweird.f32 %v690
    %vm697 = vmor %vm695, %vm696
    %v698 = vsel %vm697, %v690, %v694
    %v699 = vand.u32 2147483647, %v689
    %vm700 = vcmp.eq.f32.partialorder %v699, 8.507059e+37
    %v701 = vand.u32 %v689, 2147483648
    %v702 = vor.u32 1.1754944e-38, %v701
    %v703 = vsel %vm700, %v702, %v698
    %v704 = vmul.f32 1.0, %v703
    %v705 = vtanh.pop %v685
    %v707 = vrot.slane %v649, 6
    %v709 = vmul.f32 %v704, %v707
    %711 = vrot.lane.b32.xlu0 %v705, 32
    %v712 = vpop.permute.xlu0 %711
    %v714 = vmul.f32 %v704, %v712
    %716 = vrot.lane.b32.xlu0 %v714, 32
    %v717 = vpop.permute.xlu0 %716
    %v719 = vadd.f32 %v709, %v717
    %v720 = vtanh.pop %v719
    %722 = vrot.lane.b32.xlu0 %v720, 32
    %v723 = vpop.permute.xlu0 %722
    %v725 = vmul.f32 %v704, %v723
    %v726 = vld [vmem:[#allocation4] sm:$0xff]
    %v727 = vld [vmem:[#allocation4 + $0x8] sm:$0xff]
    %v728 = vld [vmem:[#allocation4 + $0x10] sm:$0xff]
    %v729 = vld [vmem:[#allocation4 + $0x18] sm:$0xff]
    %v730 = vld [vmem:[#allocation6] sm:$0xff]
    %v731 = vld [vmem:[#allocation6 + $0x8] sm:$0xff]
    %v732 = vld [vmem:[#allocation6 + $0x10] sm:$0xff]
    %v733 = vld [vmem:[#allocation6 + $0x18] sm:$0xff]
    %v734 = vld [vmem:[%s6] sm:$0x1]
    %s735 = scalar_lea.vmem %s9, 2
    %v736 = vld [vmem:[%s735] sm:$0x3]
    %s737 = scalar_lea.vmem [#allocation10], 2
    %v738 = vld [vmem:[%s737] sm:$0x3]
    %v740 = vsel %vm146, %v736, 0
    %742 = vmatpush.msra.mxu0 0.0
    %743 = vmatpush.msra.mxu0 0.0
    %744 = vmatpush.msra.mxu0 0.0
    %745 = vmatpush.msra.mxu0 0.0
    %746 = vmatpush.msra.mxu0 0.0
    %747 = vmatpush.msra.mxu0 0.0
    %748 = vmatpush.msra.mxu0 0.0
    %749 = vmatpush.msra.mxu0 0.0
    %750 = vmatpush.msra.mxu0 0.0
    %751 = vmatpush.msra.mxu0 0.0
    %752 = vmatpush.msra.mxu0 0.0
    %753 = vmatpush.msra.mxu0 0.0
    %754 = vmatpush.msra.mxu0 %v733
    %755 = vmatpush.msra.mxu0 %v732
    %756 = vmatpush.msra.mxu0 %v731
    %757 = vmatpush.msra.mxu0 %v730
    %758 = vmatmul.f32.gmra.mxu0 %v740
    %v759 = vpop.f32.mrf.mxu0
    %v760 = vadd.f32 0.0, %v759
    %761 = vdwg.mxu0
    %762 = vmatpush.msra.mxu0 0.0
    %763 = vmatpush.msra.mxu0 0.0
    %764 = vmatpush.msra.mxu0 0.0
    %765 = vmatpush.msra.mxu0 0.0
    %766 = vmatpush.msra.mxu0 0.0
    %767 = vmatpush.msra.mxu0 0.0
    %768 = vmatpush.msra.mxu0 0.0
    %769 = vmatpush.msra.mxu0 0.0
    %770 = vmatpush.msra.mxu0 0.0
    %771 = vmatpush.msra.mxu0 0.0
    %772 = vmatpush.msra.mxu0 0.0
    %773 = vmatpush.msra.mxu0 0.0
    %774 = vmatpush.msra.mxu0 %v729
    %775 = vmatpush.msra.mxu0 %v728
    %776 = vmatpush.msra.mxu0 %v727
    %777 = vmatpush.msra.mxu0 %v726
    %778 = vmatmul.f32.gmra.mxu0 %v244
    %v779 = vpop.f32.mrf.mxu0
    %v780 = vadd.f32 %v760, %v779
    %781 = vdwg.mxu0
    %v783 = vperm.slane %v734, 0
    %v785 = vadd.f32 %v780, %v783
    %v786 = vxor.u32 %v785, 2147483648
    %v787 = vmul.f32 %v786, 1.442695
    %v788 = vpow.pop %v787
    %v789 = vadd.f32 %v788, 1.0
    %v790 = vrcp.pop %v789
    %v791 = vmul.f32 %v789, %v790
    %v792 = vsub.f32 1.0, %v791
    %v793 = vmul.f32 %v790, %v792
    %v794 = vadd.f32 %v790, %v793
    %vm795 = vweird.f32 %v789
    %vm796 = vweird.f32 %v790
    %vm797 = vmor %vm795, %vm796
    %v798 = vsel %vm797, %v790, %v794
    %v799 = vand.u32 2147483647, %v789
    %vm800 = vcmp.eq.f32.partialorder %v799, 8.507059e+37
    %v801 = vand.u32 %v789, 2147483648
    %v802 = vor.u32 1.1754944e-38, %v801
    %v803 = vsel %vm800, %v802, %v798
    %v804 = vmul.f32 1.0, %v803
    %v805 = vtanh.pop %v785
    %807 = vrot.lane.b32.xlu0 %v738, 32
    %v808 = vpop.permute.xlu0 %807
    %v810 = vmul.f32 %v804, %v808
    %812 = vrot.lane.b32.xlu0 %v805, 32
    %v813 = vpop.permute.xlu0 %812
    %v815 = vmul.f32 %v804, %v813
    %817 = vrot.lane.b32.xlu0 %v815, 32
    %v818 = vpop.permute.xlu0 %817
    %v820 = vadd.f32 %v810, %v818
    %v821 = vtanh.pop %v820
    %823 = vrot.lane.b32.xlu0 %v821, 32
    %v824 = vpop.permute.xlu0 %823
    %v826 = vmul.f32 %v804, %v824
    %828 = vrot.lane.b32.xlu0 %v826, 64
    %v829 = vpop.permute.xlu0 %828
    %v830 = vsel %vm146, %v829, 0
    %832 = vmatpush.msra.mxu0 0.0
    %833 = vmatpush.msra.mxu0 0.0
    %834 = vmatpush.msra.mxu0 0.0
    %835 = vmatpush.msra.mxu0 0.0
    %836 = vmatpush.msra.mxu0 0.0
    %837 = vmatpush.msra.mxu0 0.0
    %838 = vmatpush.msra.mxu0 0.0
    %839 = vmatpush.msra.mxu0 0.0
    %840 = vmatpush.msra.mxu0 0.0
    %841 = vmatpush.msra.mxu0 0.0
    %842 = vmatpush.msra.mxu0 0.0
    %843 = vmatpush.msra.mxu0 0.0
    %844 = vmatpush.msra.mxu0 %v733
    %845 = vmatpush.msra.mxu0 %v732
    %846 = vmatpush.msra.mxu0 %v731
    %847 = vmatpush.msra.mxu0 %v730
    %848 = vmatmul.f32.gmra.mxu0 %v830
    %v849 = vpop.f32.mrf.mxu0
    %v850 = vadd.f32 0.0, %v849
    %851 = vdwg.mxu0
    %852 = vmatpush.msra.mxu0 0.0
    %853 = vmatpush.msra.mxu0 0.0
    %854 = vmatpush.msra.mxu0 0.0
    %855 = vmatpush.msra.mxu0 0.0
    %856 = vmatpush.msra.mxu0 0.0
    %857 = vmatpush.msra.mxu0 0.0
    %858 = vmatpush.msra.mxu0 0.0
    %859 = vmatpush.msra.mxu0 0.0
    %860 = vmatpush.msra.mxu0 0.0
    %861 = vmatpush.msra.mxu0 0.0
    %862 = vmatpush.msra.mxu0 0.0
    %863 = vmatpush.msra.mxu0 0.0
    %864 = vmatpush.msra.mxu0 %v729
    %865 = vmatpush.msra.mxu0 %v728
    %866 = vmatpush.msra.mxu0 %v727
    %867 = vmatpush.msra.mxu0 %v726
    %868 = vmatmul.f32.gmra.mxu0 %v314
    %v869 = vpop.f32.mrf.mxu0
    %v870 = vadd.f32 %v850, %v869
    %871 = vdwg.mxu0
    %v872 = vadd.f32 %v870, %v783
    %v873 = vxor.u32 %v872, 2147483648
    %v874 = vmul.f32 %v873, 1.442695
    %v875 = vpow.pop %v874
    %v876 = vadd.f32 %v875, 1.0
    %v877 = vrcp.pop %v876
    %v878 = vmul.f32 %v876, %v877
    %v879 = vsub.f32 1.0, %v878
    %v880 = vmul.f32 %v877, %v879
    %v881 = vadd.f32 %v877, %v880
    %vm882 = vweird.f32 %v876
    %vm883 = vweird.f32 %v877
    %vm884 = vmor %vm882, %vm883
    %v885 = vsel %vm884, %v877, %v881
    %v886 = vand.u32 2147483647, %v876
    %vm887 = vcmp.eq.f32.partialorder %v886, 8.507059e+37
    %v888 = vand.u32 %v876, 2147483648
    %v889 = vor.u32 1.1754944e-38, %v888
    %v890 = vsel %vm887, %v889, %v885
    %v891 = vmul.f32 1.0, %v890
    %v892 = vtanh.pop %v872
    %v893 = vmul.f32 %v891, %v820
    %895 = vrot.lane.b32.xlu0 %v892, 32
    %v896 = vpop.permute.xlu0 %895
    %v898 = vmul.f32 %v891, %v896
    %900 = vrot.lane.b32.xlu0 %v898, 32
    %v901 = vpop.permute.xlu0 %900
    %v903 = vadd.f32 %v893, %v901
    %v904 = vtanh.pop %v903
    %906 = vrot.lane.b32.xlu0 %v904, 32
    %v907 = vpop.permute.xlu0 %906
    %v909 = vmul.f32 %v891, %v907
    %911 = vrot.lane.b32.xlu0 %v909, 64
    %v912 = vpop.permute.xlu0 %911
    %v913 = vsel %vm146, %v912, 0
    %915 = vmatpush.msra.mxu0 0.0
    %916 = vmatpush.msra.mxu0 0.0
    %917 = vmatpush.msra.mxu0 0.0
    %918 = vmatpush.msra.mxu0 0.0
    %919 = vmatpush.msra.mxu0 0.0
    %920 = vmatpush.msra.mxu0 0.0
    %921 = vmatpush.msra.mxu0 0.0
    %922 = vmatpush.msra.mxu0 0.0
    %923 = vmatpush.msra.mxu0 0.0
    %924 = vmatpush.msra.mxu0 0.0
    %925 = vmatpush.msra.mxu0 0.0
    %926 = vmatpush.msra.mxu0 0.0
    %927 = vmatpush.msra.mxu0 %v733
    %928 = vmatpush.msra.mxu0 %v732
    %929 = vmatpush.msra.mxu0 %v731
    %930 = vmatpush.msra.mxu0 %v730
    %931 = vmatmul.f32.gmra.mxu0 %v913
    %v932 = vpop.f32.mrf.mxu0
    %v933 = vadd.f32 0.0, %v932
    %934 = vdwg.mxu0
    %935 = vmatpush.msra.mxu0 0.0
    %936 = vmatpush.msra.mxu0 0.0
    %937 = vmatpush.msra.mxu0 0.0
    %938 = vmatpush.msra.mxu0 0.0
    %939 = vmatpush.msra.mxu0 0.0
    %940 = vmatpush.msra.mxu0 0.0
    %941 = vmatpush.msra.mxu0 0.0
    %942 = vmatpush.msra.mxu0 0.0
    %943 = vmatpush.msra.mxu0 0.0
    %944 = vmatpush.msra.mxu0 0.0
    %945 = vmatpush.msra.mxu0 0.0
    %946 = vmatpush.msra.mxu0 0.0
    %947 = vmatpush.msra.mxu0 %v729
    %948 = vmatpush.msra.mxu0 %v728
    %949 = vmatpush.msra.mxu0 %v727
    %950 = vmatpush.msra.mxu0 %v726
    %951 = vmatmul.f32.gmra.mxu0 %v384
    %v952 = vpop.f32.mrf.mxu0
    %v953 = vadd.f32 %v933, %v952
    %954 = vdwg.mxu0
    %v955 = vadd.f32 %v953, %v783
    %v956 = vxor.u32 %v955, 2147483648
    %v957 = vmul.f32 %v956, 1.442695
    %v958 = vpow.pop %v957
    %v959 = vadd.f32 %v958, 1.0
    %v960 = vrcp.pop %v959
    %v961 = vmul.f32 %v959, %v960
    %v962 = vsub.f32 1.0, %v961
    %v963 = vmul.f32 %v960, %v962
    %v964 = vadd.f32 %v960, %v963
    %vm965 = vweird.f32 %v959
    %vm966 = vweird.f32 %v960
    %vm967 = vmor %vm965, %vm966
    %v968 = vsel %vm967, %v960, %v964
    %v969 = vand.u32 2147483647, %v959
    %vm970 = vcmp.eq.f32.partialorder %v969, 8.507059e+37
    %v971 = vand.u32 %v959, 2147483648
    %v972 = vor.u32 1.1754944e-38, %v971
    %v973 = vsel %vm970, %v972, %v968
    %v974 = vmul.f32 1.0, %v973
    %v975 = vtanh.pop %v955
    %v976 = vmul.f32 %v974, %v903
    %978 = vrot.lane.b32.xlu0 %v975, 32
    %v979 = vpop.permute.xlu0 %978
    %v981 = vmul.f32 %v974, %v979
    %983 = vrot.lane.b32.xlu0 %v981, 32
    %v984 = vpop.permute.xlu0 %983
    %v986 = vadd.f32 %v976, %v984
    %v987 = vtanh.pop %v986
    %989 = vrot.lane.b32.xlu0 %v987, 32
    %v990 = vpop.permute.xlu0 %989
    %v992 = vmul.f32 %v974, %v990
    %994 = vrot.lane.b32.xlu0 %v992, 64
    %v995 = vpop.permute.xlu0 %994
    %v996 = vsel %vm146, %v995, 0
    %998 = vmatpush.msra.mxu0 0.0
    %999 = vmatpush.msra.mxu0 0.0
    %1000 = vmatpush.msra.mxu0 0.0
    %1001 = vmatpush.msra.mxu0 0.0
    %1002 = vmatpush.msra.mxu0 0.0
    %1003 = vmatpush.msra.mxu0 0.0
    %1004 = vmatpush.msra.mxu0 0.0
    %1005 = vmatpush.msra.mxu0 0.0
    %1006 = vmatpush.msra.mxu0 0.0
    %1007 = vmatpush.msra.mxu0 0.0
    %1008 = vmatpush.msra.mxu0 0.0
    %1009 = vmatpush.msra.mxu0 0.0
    %1010 = vmatpush.msra.mxu0 %v733
    %1011 = vmatpush.msra.mxu0 %v732
    %1012 = vmatpush.msra.mxu0 %v731
    %1013 = vmatpush.msra.mxu0 %v730
    %1014 = vmatmul.f32.gmra.mxu0 %v996
    %v1015 = vpop.f32.mrf.mxu0
    %v1016 = vadd.f32 0.0, %v1015
    %1017 = vdwg.mxu0
    %1018 = vmatpush.msra.mxu0 0.0
    %1019 = vmatpush.msra.mxu0 0.0
    %1020 = vmatpush.msra.mxu0 0.0
    %1021 = vmatpush.msra.mxu0 0.0
    %1022 = vmatpush.msra.mxu0 0.0
    %1023 = vmatpush.msra.mxu0 0.0
    %1024 = vmatpush.msra.mxu0 0.0
    %1025 = vmatpush.msra.mxu0 0.0
    %1026 = vmatpush.msra.mxu0 0.0
    %1027 = vmatpush.msra.mxu0 0.0
    %1028 = vmatpush.msra.mxu0 0.0
    %1029 = vmatpush.msra.mxu0 0.0
    %1030 = vmatpush.msra.mxu0 %v729
    %1031 = vmatpush.msra.mxu0 %v728
    %1032 = vmatpush.msra.mxu0 %v727
    %1033 = vmatpush.msra.mxu0 %v726
    %1034 = vmatmul.f32.gmra.mxu0 %v454
    %v1035 = vpop.f32.mrf.mxu0
    %v1036 = vadd.f32 %v1016, %v1035
    %1037 = vdwg.mxu0
    %v1038 = vadd.f32 %v1036, %v783
    %v1039 = vxor.u32 %v1038, 2147483648
    %v1040 = vmul.f32 %v1039, 1.442695
    %v1041 = vpow.pop %v1040
    %v1042 = vadd.f32 %v1041, 1.0
    %v1043 = vrcp.pop %v1042
    %v1044 = vmul.f32 %v1042, %v1043
    %v1045 = vsub.f32 1.0, %v1044
    %v1046 = vmul.f32 %v1043, %v1045
    %v1047 = vadd.f32 %v1043, %v1046
    %vm1048 = vweird.f32 %v1042
    %vm1049 = vweird.f32 %v1043
    %vm1050 = vmor %vm1048, %vm1049
    %v1051 = vsel %vm1050, %v1043, %v1047
    %v1052 = vand.u32 2147483647, %v1042
    %vm1053 = vcmp.eq.f32.partialorder %v1052, 8.507059e+37
    %v1054 = vand.u32 %v1042, 2147483648
    %v1055 = vor.u32 1.1754944e-38, %v1054
    %v1056 = vsel %vm1053, %v1055, %v1051
    %v1057 = vmul.f32 1.0, %v1056
    %v1058 = vtanh.pop %v1038
    %v1059 = vmul.f32 %v1057, %v986
    %1061 = vrot.lane.b32.xlu0 %v1058, 32
    %v1062 = vpop.permute.xlu0 %1061
    %v1064 = vmul.f32 %v1057, %v1062
    %1066 = vrot.lane.b32.xlu0 %v1064, 32
    %v1067 = vpop.permute.xlu0 %1066
    %v1069 = vadd.f32 %v1059, %v1067
    %v1070 = vtanh.pop %v1069
    %1072 = vrot.lane.b32.xlu0 %v1070, 32
    %v1073 = vpop.permute.xlu0 %1072
    %v1075 = vmul.f32 %v1057, %v1073
    %1077 = vrot.lane.b32.xlu0 %v1075, 64
    %v1078 = vpop.permute.xlu0 %1077
    %v1079 = vsel %vm146, %v1078, 0
    %1081 = vmatpush.msra.mxu0 0.0
    %1082 = vmatpush.msra.mxu0 0.0
    %1083 = vmatpush.msra.mxu0 0.0
    %1084 = vmatpush.msra.mxu0 0.0
    %1085 = vmatpush.msra.mxu0 0.0
    %1086 = vmatpush.msra.mxu0 0.0
    %1087 = vmatpush.msra.mxu0 0.0
    %1088 = vmatpush.msra.mxu0 0.0
    %1089 = vmatpush.msra.mxu0 0.0
    %1090 = vmatpush.msra.mxu0 0.0
    %1091 = vmatpush.msra.mxu0 0.0
    %1092 = vmatpush.msra.mxu0 0.0
    %1093 = vmatpush.msra.mxu0 %v733
    %1094 = vmatpush.msra.mxu0 %v732
    %1095 = vmatpush.msra.mxu0 %v731
    %1096 = vmatpush.msra.mxu0 %v730
    %1097 = vmatmul.f32.gmra.mxu0 %v1079
    %v1098 = vpop.f32.mrf.mxu0
    %v1099 = vadd.f32 0.0, %v1098
    %1100 = vdwg.mxu0
    %1101 = vmatpush.msra.mxu0 0.0
    %1102 = vmatpush.msra.mxu0 0.0
    %1103 = vmatpush.msra.mxu0 0.0
    %1104 = vmatpush.msra.mxu0 0.0
    %1105 = vmatpush.msra.mxu0 0.0
    %1106 = vmatpush.msra.mxu0 0.0
    %1107 = vmatpush.msra.mxu0 0.0
    %1108 = vmatpush.msra.mxu0 0.0
    %1109 = vmatpush.msra.mxu0 0.0
    %1110 = vmatpush.msra.mxu0 0.0
    %1111 = vmatpush.msra.mxu0 0.0
    %1112 = vmatpush.msra.mxu0 0.0
    %1113 = vmatpush.msra.mxu0 %v729
    %1114 = vmatpush.msra.mxu0 %v728
    %1115 = vmatpush.msra.mxu0 %v727
    %1116 = vmatpush.msra.mxu0 %v726
    %1117 = vmatmul.f32.gmra.mxu0 %v520
    %v1118 = vpop.f32.mrf.mxu0
    %v1119 = vadd.f32 %v1099, %v1118
    %1120 = vdwg.mxu0
    %v1121 = vadd.f32 %v1119, %v783
    %v1122 = vxor.u32 %v1121, 2147483648
    %v1123 = vmul.f32 %v1122, 1.442695
    %v1124 = vpow.pop %v1123
    %v1125 = vadd.f32 %v1124, 1.0
    %v1126 = vrcp.pop %v1125
    %v1127 = vmul.f32 %v1125, %v1126
    %v1128 = vsub.f32 1.0, %v1127
    %v1129 = vmul.f32 %v1126, %v1128
    %v1130 = vadd.f32 %v1126, %v1129
    %vm1131 = vweird.f32 %v1125
    %vm1132 = vweird.f32 %v1126
    %vm1133 = vmor %vm1131, %vm1132
    %v1134 = vsel %vm1133, %v1126, %v1130
    %v1135 = vand.u32 2147483647, %v1125
    %vm1136 = vcmp.eq.f32.partialorder %v1135, 8.507059e+37
    %v1137 = vand.u32 %v1125, 2147483648
    %v1138 = vor.u32 1.1754944e-38, %v1137
    %v1139 = vsel %vm1136, %v1138, %v1134
    %v1140 = vmul.f32 1.0, %v1139
    %v1141 = vtanh.pop %v1121
    %v1142 = vmul.f32 %v1140, %v1069
    %1144 = vrot.lane.b32.xlu0 %v1141, 32
    %v1145 = vpop.permute.xlu0 %1144
    %v1147 = vmul.f32 %v1140, %v1145
    %1149 = vrot.lane.b32.xlu0 %v1147, 32
    %v1150 = vpop.permute.xlu0 %1149
    %v1152 = vadd.f32 %v1142, %v1150
    %v1153 = vtanh.pop %v1152
    %1155 = vrot.lane.b32.xlu0 %v1153, 32
    %v1156 = vpop.permute.xlu0 %1155
    %v1158 = vmul.f32 %v1140, %v1156
    %1160 = vrot.lane.b32.xlu0 %v1158, 64
    %v1161 = vpop.permute.xlu0 %1160
    %v1162 = vsel %vm146, %v1161, 0
    %1164 = vmatpush.msra.mxu0 0.0
    %1165 = vmatpush.msra.mxu0 0.0
    %1166 = vmatpush.msra.mxu0 0.0
    %1167 = vmatpush.msra.mxu0 0.0
    %1168 = vmatpush.msra.mxu0 0.0
    %1169 = vmatpush.msra.mxu0 0.0
    %1170 = vmatpush.msra.mxu0 0.0
    %1171 = vmatpush.msra.mxu0 0.0
    %1172 = vmatpush.msra.mxu0 0.0
    %1173 = vmatpush.msra.mxu0 0.0
    %1174 = vmatpush.msra.mxu0 0.0
    %1175 = vmatpush.msra.mxu0 0.0
    %1176 = vmatpush.msra.mxu0 %v733
    %1177 = vmatpush.msra.mxu0 %v732
    %1178 = vmatpush.msra.mxu0 %v731
    %1179 = vmatpush.msra.mxu0 %v730
    %1180 = vmatmul.f32.gmra.mxu0 %v1162
    %v1181 = vpop.f32.mrf.mxu0
    %v1182 = vadd.f32 0.0, %v1181
    %1183 = vdwg.mxu0
    %1184 = vmatpush.msra.mxu0 0.0
    %1185 = vmatpush.msra.mxu0 0.0
    %1186 = vmatpush.msra.mxu0 0.0
    %1187 = vmatpush.msra.mxu0 0.0
    %1188 = vmatpush.msra.mxu0 0.0
    %1189 = vmatpush.msra.mxu0 0.0
    %1190 = vmatpush.msra.mxu0 0.0
    %1191 = vmatpush.msra.mxu0 0.0
    %1192 = vmatpush.msra.mxu0 0.0
    %1193 = vmatpush.msra.mxu0 0.0
    %1194 = vmatpush.msra.mxu0 0.0
    %1195 = vmatpush.msra.mxu0 0.0
    %1196 = vmatpush.msra.mxu0 %v729
    %1197 = vmatpush.msra.mxu0 %v728
    %1198 = vmatpush.msra.mxu0 %v727
    %1199 = vmatpush.msra.mxu0 %v726
    %1200 = vmatmul.f32.gmra.mxu0 %v590
    %v1201 = vpop.f32.mrf.mxu0
    %v1202 = vadd.f32 %v1182, %v1201
    %1203 = vdwg.mxu0
    %v1204 = vadd.f32 %v1202, %v783
    %v1205 = vxor.u32 %v1204, 2147483648
    %v1206 = vmul.f32 %v1205, 1.442695
    %v1207 = vpow.pop %v1206
    %v1208 = vadd.f32 %v1207, 1.0
    %v1209 = vrcp.pop %v1208
    %v1210 = vmul.f32 %v1208, %v1209
    %v1211 = vsub.f32 1.0, %v1210
    %v1212 = vmul.f32 %v1209, %v1211
    %v1213 = vadd.f32 %v1209, %v1212
    %vm1214 = vweird.f32 %v1208
    %vm1215 = vweird.f32 %v1209
    %vm1216 = vmor %vm1214, %vm1215
    %v1217 = vsel %vm1216, %v1209, %v1213
    %v1218 = vand.u32 2147483647, %v1208
    %vm1219 = vcmp.eq.f32.partialorder %v1218, 8.507059e+37
    %v1220 = vand.u32 %v1208, 2147483648
    %v1221 = vor.u32 1.1754944e-38, %v1220
    %v1222 = vsel %vm1219, %v1221, %v1217
    %v1223 = vmul.f32 1.0, %v1222
    %v1224 = vtanh.pop %v1204
    %v1225 = vmul.f32 %v1223, %v1152
    %1227 = vrot.lane.b32.xlu0 %v1224, 32
    %v1228 = vpop.permute.xlu0 %1227
    %v1230 = vmul.f32 %v1223, %v1228
    %1232 = vrot.lane.b32.xlu0 %v1230, 32
    %v1233 = vpop.permute.xlu0 %1232
    %v1235 = vadd.f32 %v1225, %v1233
    %v1236 = vtanh.pop %v1235
    %1238 = vrot.lane.b32.xlu0 %v1236, 32
    %v1239 = vpop.permute.xlu0 %1238
    %v1241 = vmul.f32 %v1223, %v1239
    %1243 = vrot.lane.b32.xlu0 %v1241, 64
    %v1244 = vpop.permute.xlu0 %1243
    %v1245 = vsel %vm146, %v1244, 0
    %1247 = vmatpush.msra.mxu0 0.0
    %1248 = vmatpush.msra.mxu0 0.0
    %1249 = vmatpush.msra.mxu0 0.0
    %1250 = vmatpush.msra.mxu0 0.0
    %1251 = vmatpush.msra.mxu0 0.0
    %1252 = vmatpush.msra.mxu0 0.0
    %1253 = vmatpush.msra.mxu0 0.0
    %1254 = vmatpush.msra.mxu0 0.0
    %1255 = vmatpush.msra.mxu0 0.0
    %1256 = vmatpush.msra.mxu0 0.0
    %1257 = vmatpush.msra.mxu0 0.0
    %1258 = vmatpush.msra.mxu0 0.0
    %1259 = vmatpush.msra.mxu0 %v733
    %1260 = vmatpush.msra.mxu0 %v732
    %1261 = vmatpush.msra.mxu0 %v731
    %1262 = vmatpush.msra.mxu0 %v730
    %1263 = vmatmul.f32.gmra.mxu0 %v1245
    %v1264 = vpop.f32.mrf.mxu0
    %v1265 = vadd.f32 0.0, %v1264
    %1266 = vdwg.mxu0
    %1267 = vmatpush.msra.mxu0 0.0
    %1268 = vmatpush.msra.mxu0 0.0
    %1269 = vmatpush.msra.mxu0 0.0
    %1270 = vmatpush.msra.mxu0 0.0
    %1271 = vmatpush.msra.mxu0 0.0
    %1272 = vmatpush.msra.mxu0 0.0
    %1273 = vmatpush.msra.mxu0 0.0
    %1274 = vmatpush.msra.mxu0 0.0
    %1275 = vmatpush.msra.mxu0 0.0
    %1276 = vmatpush.msra.mxu0 0.0
    %1277 = vmatpush.msra.mxu0 0.0
    %1278 = vmatpush.msra.mxu0 0.0
    %1279 = vmatpush.msra.mxu0 %v729
    %1280 = vmatpush.msra.mxu0 %v728
    %1281 = vmatpush.msra.mxu0 %v727
    %1282 = vmatpush.msra.mxu0 %v726
    %1283 = vmatmul.f32.gmra.mxu0 %v660
    %v1284 = vpop.f32.mrf.mxu0
    %v1285 = vadd.f32 %v1265, %v1284
    %1286 = vdwg.mxu0
    %v1287 = vadd.f32 %v1285, %v783
    %v1288 = vxor.u32 %v1287, 2147483648
    %v1289 = vmul.f32 %v1288, 1.442695
    %v1290 = vpow.pop %v1289
    %v1291 = vadd.f32 %v1290, 1.0
    %v1292 = vrcp.pop %v1291
    %v1293 = vmul.f32 %v1291, %v1292
    %v1294 = vsub.f32 1.0, %v1293
    %v1295 = vmul.f32 %v1292, %v1294
    %v1296 = vadd.f32 %v1292, %v1295
    %vm1297 = vweird.f32 %v1291
    %vm1298 = vweird.f32 %v1292
    %vm1299 = vmor %vm1297, %vm1298
    %v1300 = vsel %vm1299, %v1292, %v1296
    %v1301 = vand.u32 2147483647, %v1291
    %vm1302 = vcmp.eq.f32.partialorder %v1301, 8.507059e+37
    %v1303 = vand.u32 %v1291, 2147483648
    %v1304 = vor.u32 1.1754944e-38, %v1303
    %v1305 = vsel %vm1302, %v1304, %v1300
    %v1306 = vmul.f32 1.0, %v1305
    %v1307 = vtanh.pop %v1287
    %v1308 = vmul.f32 %v1306, %v1235
    %1310 = vrot.lane.b32.xlu0 %v1307, 32
    %v1311 = vpop.permute.xlu0 %1310
    %v1313 = vmul.f32 %v1306, %v1311
    %1315 = vrot.lane.b32.xlu0 %v1313, 32
    %v1316 = vpop.permute.xlu0 %1315
    %v1318 = vadd.f32 %v1308, %v1316
    %v1319 = vtanh.pop %v1318
    %1321 = vrot.lane.b32.xlu0 %v1319, 32
    %v1322 = vpop.permute.xlu0 %1321
    %v1324 = vmul.f32 %v1306, %v1322
    %1326 = vrot.lane.b32.xlu0 %v1324, 64
    %v1327 = vpop.permute.xlu0 %1326
    %v1328 = vsel %vm146, %v1327, 0
    %1330 = vmatpush.msra.mxu0 0.0
    %1331 = vmatpush.msra.mxu0 0.0
    %1332 = vmatpush.msra.mxu0 0.0
    %1333 = vmatpush.msra.mxu0 0.0
    %1334 = vmatpush.msra.mxu0 0.0
    %1335 = vmatpush.msra.mxu0 0.0
    %1336 = vmatpush.msra.mxu0 0.0
    %1337 = vmatpush.msra.mxu0 0.0
    %1338 = vmatpush.msra.mxu0 0.0
    %1339 = vmatpush.msra.mxu0 0.0
    %1340 = vmatpush.msra.mxu0 0.0
    %1341 = vmatpush.msra.mxu0 0.0
    %1342 = vmatpush.msra.mxu0 %v733
    %1343 = vmatpush.msra.mxu0 %v732
    %1344 = vmatpush.msra.mxu0 %v731
    %1345 = vmatpush.msra.mxu0 %v730
    %1346 = vmatmul.f32.gmra.mxu0 %v1328
    %v1347 = vpop.f32.mrf.mxu0
    %v1348 = vadd.f32 0.0, %v1347
    %1349 = vdwg.mxu0
    %v1351 = vrot.slane %v725, 6
    %1352 = vrot.lane.b32.xlu0 %v1351, 64
    %v1353 = vpop.permute.xlu0 %1352
    %v1354 = vsel %vm146, %v1353, 0
    %1356 = vmatpush.msra.mxu0 0.0
    %1357 = vmatpush.msra.mxu0 0.0
    %1358 = vmatpush.msra.mxu0 0.0
    %1359 = vmatpush.msra.mxu0 0.0
    %1360 = vmatpush.msra.mxu0 0.0
    %1361 = vmatpush.msra.mxu0 0.0
    %1362 = vmatpush.msra.mxu0 0.0
    %1363 = vmatpush.msra.mxu0 0.0
    %1364 = vmatpush.msra.mxu0 0.0
    %1365 = vmatpush.msra.mxu0 0.0
    %1366 = vmatpush.msra.mxu0 0.0
    %1367 = vmatpush.msra.mxu0 0.0
    %1368 = vmatpush.msra.mxu0 %v729
    %1369 = vmatpush.msra.mxu0 %v728
    %1370 = vmatpush.msra.mxu0 %v727
    %1371 = vmatpush.msra.mxu0 %v726
    %1372 = vmatmul.f32.gmra.mxu0 %v1354
    %v1373 = vpop.f32.mrf.mxu0
    %v1374 = vadd.f32 %v1348, %v1373
    %1375 = vdwg.mxu0
    %v1376 = vadd.f32 %v1374, %v783
    %v1377 = vxor.u32 %v1376, 2147483648
    %v1378 = vmul.f32 %v1377, 1.442695
    %v1379 = vpow.pop %v1378
    %v1380 = vadd.f32 %v1379, 1.0
    %v1381 = vrcp.pop %v1380
    %v1382 = vmul.f32 %v1380, %v1381
    %v1383 = vsub.f32 1.0, %v1382
    %v1384 = vmul.f32 %v1381, %v1383
    %v1385 = vadd.f32 %v1381, %v1384
    %vm1386 = vweird.f32 %v1380
    %vm1387 = vweird.f32 %v1381
    %vm1388 = vmor %vm1386, %vm1387
    %v1389 = vsel %vm1388, %v1381, %v1385
    %v1390 = vand.u32 2147483647, %v1380
    %vm1391 = vcmp.eq.f32.partialorder %v1390, 8.507059e+37
    %v1392 = vand.u32 %v1380, 2147483648
    %v1393 = vor.u32 1.1754944e-38, %v1392
    %v1394 = vsel %vm1391, %v1393, %v1389
    %v1395 = vmul.f32 1.0, %v1394
    %v1396 = vtanh.pop %v1376
    %v1397 = vmul.f32 %v1395, %v1318
    %1399 = vrot.lane.b32.xlu0 %v1396, 32
    %v1400 = vpop.permute.xlu0 %1399
    %v1402 = vmul.f32 %v1395, %v1400
    %1404 = vrot.lane.b32.xlu0 %v1402, 32
    %v1405 = vpop.permute.xlu0 %1404
    %v1407 = vadd.f32 %v1397, %v1405
    %v1408 = vtanh.pop %v1407
    %1410 = vrot.lane.b32.xlu0 %v1408, 32
    %v1411 = vpop.permute.xlu0 %1410
    %v1413 = vmul.f32 %v1395, %v1411
    %v1414 = vld [vmem:[#allocation7] sm:$0xff]
    %v1415 = vld [vmem:[#allocation7 + $0x8] sm:$0xff]
    %v1416 = vld [vmem:[#allocation7 + $0x10] sm:$0xff]
    %v1417 = vld [vmem:[#allocation7 + $0x18] sm:$0xff]
    %v1418 = vld [vmem:[#allocation9] sm:$0x1]
    %v1420 = vperm.slane %v1418, 0
    %1422 = vmatpush.msra.mxu0 0.0
    %1423 = vmatpush.msra.mxu0 0.0
    %1424 = vmatpush.msra.mxu0 0.0
    %1425 = vmatpush.msra.mxu0 0.0
    %1426 = vmatpush.msra.mxu0 0.0
    %1427 = vmatpush.msra.mxu0 0.0
    %1428 = vmatpush.msra.mxu0 0.0
    %1429 = vmatpush.msra.mxu0 0.0
    %1430 = vmatpush.msra.mxu0 0.0
    %1431 = vmatpush.msra.mxu0 0.0
    %1432 = vmatpush.msra.mxu0 0.0
    %1433 = vmatpush.msra.mxu0 0.0
    %1434 = vmatpush.msra.mxu0 %v1417
    %1435 = vmatpush.msra.mxu0 %v1416
    %1436 = vmatpush.msra.mxu0 %v1415
    %1437 = vmatpush.msra.mxu0 %v1414
    %1438 = vmatmul.f32.gmra.mxu0 %v830
    %v1439 = vpop.f32.mrf.mxu0
    %v1440 = vadd.f32 %v1420, %v1439
    %1441 = vdwg.mxu0
    %1442 = vmatpush.msra.mxu0 0.0
    %1443 = vmatpush.msra.mxu0 0.0
    %1444 = vmatpush.msra.mxu0 0.0
    %1445 = vmatpush.msra.mxu0 0.0
    %1446 = vmatpush.msra.mxu0 0.0
    %1447 = vmatpush.msra.mxu0 0.0
    %1448 = vmatpush.msra.mxu0 0.0
    %1449 = vmatpush.msra.mxu0 0.0
    %1450 = vmatpush.msra.mxu0 0.0
    %1451 = vmatpush.msra.mxu0 0.0
    %1452 = vmatpush.msra.mxu0 0.0
    %1453 = vmatpush.msra.mxu0 0.0
    %1454 = vmatpush.msra.mxu0 %v1417
    %1455 = vmatpush.msra.mxu0 %v1416
    %1456 = vmatpush.msra.mxu0 %v1415
    %1457 = vmatpush.msra.mxu0 %v1414
    %1458 = vmatmul.f32.gmra.mxu0 %v913
    %v1459 = vpop.f32.mrf.mxu0
    %v1460 = vadd.f32 %v1420, %v1459
    %1461 = vdwg.mxu0
    %1462 = vmatpush.msra.mxu0 0.0
    %1463 = vmatpush.msra.mxu0 0.0
    %1464 = vmatpush.msra.mxu0 0.0
    %1465 = vmatpush.msra.mxu0 0.0
    %1466 = vmatpush.msra.mxu0 0.0
    %1467 = vmatpush.msra.mxu0 0.0
    %1468 = vmatpush.msra.mxu0 0.0
    %1469 = vmatpush.msra.mxu0 0.0
    %1470 = vmatpush.msra.mxu0 0.0
    %1471 = vmatpush.msra.mxu0 0.0
    %1472 = vmatpush.msra.mxu0 0.0
    %1473 = vmatpush.msra.mxu0 0.0
    %1474 = vmatpush.msra.mxu0 %v1417
    %1475 = vmatpush.msra.mxu0 %v1416
    %1476 = vmatpush.msra.mxu0 %v1415
    %1477 = vmatpush.msra.mxu0 %v1414
    %1478 = vmatmul.f32.gmra.mxu0 %v996
    %v1479 = vpop.f32.mrf.mxu0
    %v1480 = vadd.f32 %v1420, %v1479
    %1481 = vdwg.mxu0
    %1482 = vmatpush.msra.mxu0 0.0
    %1483 = vmatpush.msra.mxu0 0.0
    %1484 = vmatpush.msra.mxu0 0.0
    %1485 = vmatpush.msra.mxu0 0.0
    %1486 = vmatpush.msra.mxu0 0.0
    %1487 = vmatpush.msra.mxu0 0.0
    %1488 = vmatpush.msra.mxu0 0.0
    %1489 = vmatpush.msra.mxu0 0.0
    %1490 = vmatpush.msra.mxu0 0.0
    %1491 = vmatpush.msra.mxu0 0.0
    %1492 = vmatpush.msra.mxu0 0.0
    %1493 = vmatpush.msra.mxu0 0.0
    %1494 = vmatpush.msra.mxu0 %v1417
    %1495 = vmatpush.msra.mxu0 %v1416
    %1496 = vmatpush.msra.mxu0 %v1415
    %1497 = vmatpush.msra.mxu0 %v1414
    %1498 = vmatmul.f32.gmra.mxu0 %v1079
    %v1499 = vpop.f32.mrf.mxu0
    %v1500 = vadd.f32 %v1420, %v1499
    %1501 = vdwg.mxu0
    %1502 = vmatpush.msra.mxu0 0.0
    %1503 = vmatpush.msra.mxu0 0.0
    %1504 = vmatpush.msra.mxu0 0.0
    %1505 = vmatpush.msra.mxu0 0.0
    %1506 = vmatpush.msra.mxu0 0.0
    %1507 = vmatpush.msra.mxu0 0.0
    %1508 = vmatpush.msra.mxu0 0.0
    %1509 = vmatpush.msra.mxu0 0.0
    %1510 = vmatpush.msra.mxu0 0.0
    %1511 = vmatpush.msra.mxu0 0.0
    %1512 = vmatpush.msra.mxu0 0.0
    %1513 = vmatpush.msra.mxu0 0.0
    %1514 = vmatpush.msra.mxu0 %v1417
    %1515 = vmatpush.msra.mxu0 %v1416
    %1516 = vmatpush.msra.mxu0 %v1415
    %1517 = vmatpush.msra.mxu0 %v1414
    %1518 = vmatmul.f32.gmra.mxu0 %v1162
    %v1519 = vpop.f32.mrf.mxu0
    %v1520 = vadd.f32 %v1420, %v1519
    %1521 = vdwg.mxu0
    %1522 = vmatpush.msra.mxu0 0.0
    %1523 = vmatpush.msra.mxu0 0.0
    %1524 = vmatpush.msra.mxu0 0.0
    %1525 = vmatpush.msra.mxu0 0.0
    %1526 = vmatpush.msra.mxu0 0.0
    %1527 = vmatpush.msra.mxu0 0.0
    %1528 = vmatpush.msra.mxu0 0.0
    %1529 = vmatpush.msra.mxu0 0.0
    %1530 = vmatpush.msra.mxu0 0.0
    %1531 = vmatpush.msra.mxu0 0.0
    %1532 = vmatpush.msra.mxu0 0.0
    %1533 = vmatpush.msra.mxu0 0.0
    %1534 = vmatpush.msra.mxu0 %v1417
    %1535 = vmatpush.msra.mxu0 %v1416
    %1536 = vmatpush.msra.mxu0 %v1415
    %1537 = vmatpush.msra.mxu0 %v1414
    %1538 = vmatmul.f32.gmra.mxu0 %v1245
    %v1539 = vpop.f32.mrf.mxu0
    %v1540 = vadd.f32 %v1420, %v1539
    %1541 = vdwg.mxu0
    %1542 = vmatpush.msra.mxu0 0.0
    %1543 = vmatpush.msra.mxu0 0.0
    %1544 = vmatpush.msra.mxu0 0.0
    %1545 = vmatpush.msra.mxu0 0.0
    %1546 = vmatpush.msra.mxu0 0.0
    %1547 = vmatpush.msra.mxu0 0.0
    %1548 = vmatpush.msra.mxu0 0.0
    %1549 = vmatpush.msra.mxu0 0.0
    %1550 = vmatpush.msra.mxu0 0.0
    %1551 = vmatpush.msra.mxu0 0.0
    %1552 = vmatpush.msra.mxu0 0.0
    %1553 = vmatpush.msra.mxu0 0.0
    %1554 = vmatpush.msra.mxu0 %v1417
    %1555 = vmatpush.msra.mxu0 %v1416
    %1556 = vmatpush.msra.mxu0 %v1415
    %1557 = vmatpush.msra.mxu0 %v1414
    %1558 = vmatmul.f32.gmra.mxu0 %v1328
    %v1559 = vpop.f32.mrf.mxu0
    %v1560 = vadd.f32 %v1420, %v1559
    %1561 = vdwg.mxu0
    %1563 = vrot.lane.b32.xlu0 %v1413, 64
    %v1564 = vpop.permute.xlu0 %1563
    %v1565 = vsel %vm146, %v1564, 0
    %1567 = vmatpush.msra.mxu0 0.0
    %1568 = vmatpush.msra.mxu0 0.0
    %1569 = vmatpush.msra.mxu0 0.0
    %1570 = vmatpush.msra.mxu0 0.0
    %1571 = vmatpush.msra.mxu0 0.0
    %1572 = vmatpush.msra.mxu0 0.0
    %1573 = vmatpush.msra.mxu0 0.0
    %1574 = vmatpush.msra.mxu0 0.0
    %1575 = vmatpush.msra.mxu0 0.0
    %1576 = vmatpush.msra.mxu0 0.0
    %1577 = vmatpush.msra.mxu0 0.0
    %1578 = vmatpush.msra.mxu0 0.0
    %1579 = vmatpush.msra.mxu0 %v1417
    %1580 = vmatpush.msra.mxu0 %v1416
    %1581 = vmatpush.msra.mxu0 %v1415
    %1582 = vmatpush.msra.mxu0 %v1414
    %1583 = vmatmul.f32.gmra.mxu0 %v1565
    %v1584 = vpop.f32.mrf.mxu0
    %v1585 = vadd.f32 %v1420, %v1584
    %1586 = vdwg.mxu0
    %v1587 = vmax.f32 %v1440, %v1460
    %v1588 = vmax.f32 %v1587, %v1480
    %v1589 = vmax.f32 %v1588, %v1500
    %v1590 = vmax.f32 %v1589, %v1520
    %v1591 = vmax.f32 %v1590, %v1540
    %v1592 = vmax.f32 %v1591, %v1560
    %v1593 = vmax.f32 %v1592, %v1585
    %v1594 = vsub.f32 %v1440, %v1593
    %v1595 = vmul.f32 %v1594, 1.442695
    %v1596 = vpow.pop %v1595
    %v1597 = vsub.f32 %v1460, %v1593
    %v1598 = vmul.f32 %v1597, 1.442695
    %v1599 = vpow.pop %v1598
    %v1600 = vsub.f32 %v1480, %v1593
    %v1601 = vmul.f32 %v1600, 1.442695
    %v1602 = vpow.pop %v1601
    %v1603 = vsub.f32 %v1500, %v1593
    %v1604 = vmul.f32 %v1603, 1.442695
    %v1605 = vpow.pop %v1604
    %v1606 = vsub.f32 %v1520, %v1593
    %v1607 = vmul.f32 %v1606, 1.442695
    %v1608 = vpow.pop %v1607
    %v1609 = vsub.f32 %v1540, %v1593
    %v1610 = vmul.f32 %v1609, 1.442695
    %v1611 = vpow.pop %v1610
    %v1612 = vsub.f32 %v1560, %v1593
    %v1613 = vmul.f32 %v1612, 1.442695
    %v1614 = vpow.pop %v1613
    %v1615 = vsub.f32 %v1585, %v1593
    %v1616 = vmul.f32 %v1615, 1.442695
    %v1617 = vpow.pop %v1616
    %v1618 = vadd.f32 %v1596, %v1599
    %v1619 = vadd.f32 %v1618, %v1602
    %v1620 = vadd.f32 %v1619, %v1605
    %v1621 = vadd.f32 %v1620, %v1608
    %v1622 = vadd.f32 %v1621, %v1611
    %v1623 = vadd.f32 %v1622, %v1614
    %v1624 = vadd.f32 %v1623, %v1617
    %v1625 = vrcp.pop %v1624
    %v1626 = vmul.f32 %v1624, %v1625
    %v1627 = vsub.f32 1.0, %v1626
    %v1628 = vmul.f32 %v1625, %v1627
    %v1629 = vadd.f32 %v1625, %v1628
    %vm1630 = vweird.f32 %v1624
    %vm1631 = vweird.f32 %v1625
    %vm1632 = vmor %vm1630, %vm1631
    %v1633 = vsel %vm1632, %v1625, %v1629
    %v1634 = vand.u32 2147483647, %v1624
    %vm1635 = vcmp.eq.f32.partialorder %v1634, 8.507059e+37
    %v1636 = vand.u32 %v1624, 2147483648
    %v1637 = vor.u32 1.1754944e-38, %v1636
    %v1638 = vsel %vm1635, %v1637, %v1633
    %v1639 = vmul.f32 1.0, %v1638
    %v1640 = vmul.f32 %v1596, %v1639
    %vm1641 = vcmask 254976
    %1642 = vst.msk [vmem:[%s11] sm:$0x3] %vm1641, %v1640
    %v1643 = vmul.f32 %v1599, %v1639
    %s1644 = scalar_lea.vmem %s11, 2
    %1645 = vst.msk [vmem:[%s1644] sm:$0x3] %vm1641, %v1643
    %v1646 = vmul.f32 %v1602, %v1639
    %s1647 = scalar_lea.vmem %s11, 4
    %1648 = vst.msk [vmem:[%s1647] sm:$0x3] %vm1641, %v1646
    %v1649 = vmul.f32 %v1605, %v1639
    %s1650 = scalar_lea.vmem %s11, 6
    %1651 = vst.msk [vmem:[%s1650] sm:$0x3] %vm1641, %v1649
    %v1652 = vmul.f32 %v1608, %v1639
    %s1653 = scalar_lea.vmem %s11, 8
    %1654 = vst.msk [vmem:[%s1653] sm:$0x3] %vm1641, %v1652
    %v1655 = vmul.f32 %v1611, %v1639
    %s1656 = scalar_lea.vmem %s11, 10
    %1657 = vst.msk [vmem:[%s1656] sm:$0x3] %vm1641, %v1655
    %v1658 = vmul.f32 %v1614, %v1639
    %s1659 = scalar_lea.vmem %s11, 12
    %1660 = vst.msk [vmem:[%s1659] sm:$0x3] %vm1641, %v1658
    %v1661 = vmul.f32 %v1617, %v1639
    %s1662 = scalar_lea.vmem %s11, 14
    %1663 = vst.msk [vmem:[%s1662] sm:$0x3] %vm1641, %v1661
    // Predicated region
    $region70: #{decoder_forward.1} parent=1 // pred_check
      _
    $region71: #{decoder_forward.1} parent=1 // pred_check_branch
      %1665 = sbr.rel (0) target = $region73
    $region72: #{decoder_forward.1} parent=1 // pred_region
      _
    $region73: #{decoder_forward.1} parent=1 // pred_fallthru
      _
    // Predicated region
    $region74: #{decoder_forward.1} parent=1 // pred_check
      _
    $region75: #{decoder_forward.1} parent=1 // pred_check_branch
      %1667 = sbr.rel (0) target = $region77
    $region76: #{decoder_forward.1} parent=1 // pred_region
      _
    $region77: #{decoder_forward.1} parent=1 // pred_fallthru
      _
    %1668 = vsyncpa [#allocation3], 1
    %1669 = vsyncpa [#allocation5], 1
    %1670 = vsyncpa [#allocation8], 1
    %1671 = vsyncpa [#allocation11], 1

</llo_original>
